<compile_context>
chip_gen: v7x
topology: tpu7x:2x2x1
jax: 0.10.0
libtpu: 0.0.40
codegen_flags: <defaults>
</compile_context>

<pallas_src>
import functools

import jax
import jax.numpy as jnp
from jax import lax
from jax.experimental import pallas as pl
from jax.experimental.pallas import tpu as pltpu


def _round_up(n, m):
    return ((n + m - 1) // m) * m


# --------------------------------------------------------------------------
# Fused kernel: per-chunk input projection + serial recurrence.
# --------------------------------------------------------------------------
def _lstm_fused_kernel(x_ref, wx_ref, b4_ref, wh_ref, whp_ref, bp_ref,
                       out_ref, xw_sc, h_sc, c_sc,
                       *, hp, seq_len, chunk, unroll):
    ci = pl.program_id(0)

    @pl.when(ci == 0)
    def _():
        h_sc[...] = jnp.zeros_like(h_sc)
        c_sc[...] = jnp.zeros_like(c_sc)

    # ---- prologue: input projection for the whole chunk (throughput-bound,
    # M = Tc*Bp rows), result kept in VMEM scratch — no XW HBM round-trip.
    tc, bp, dp = x_ref.shape
    x2d = x_ref[...].reshape(tc * bp, dp)                       # (Tc*Bp, Dp)
    xw = (jnp.dot(x2d, wx_ref[...], preferred_element_type=jnp.float32)
          + b4_ref[...])                                        # f32
    xw_sc[...] = xw.reshape(tc, bp, -1)                         # (Tc, Bp, 4Hp)

    needs_mask = (seq_len % chunk) != 0          # static Python bool
    wh = wh_ref[...]                             # W_h4 resident for the chunk
    mm_dtype = wh.dtype

    def step(t, carry):
        h, c = carry
        # single fused gate matmul: (Bp,Hp) @ (Hp,4Hp) -> (Bp,4Hp), f32 acc
        pre = xw_sc[t] + jnp.dot(h.astype(mm_dtype), wh,
                                 preferred_element_type=jnp.float32)
        # slice-then-activate: no wasted sigmoid on the g quarter
        g = jnp.tanh(pre[:, 0 * hp:1 * hp])
        act = jax.nn.sigmoid(pre[:, 1 * hp:4 * hp])
        i = act[:, 0 * hp:1 * hp]
        f = act[:, 1 * hp:2 * hp]
        o = act[:, 2 * hp:3 * hp]
        c_new = g * i + c * f
        h_new = jnp.tanh(c_new) * o
        if needs_mask:                           # only when T % Tc != 0
            valid = (ci * chunk + t) < seq_len
            h_new = jnp.where(valid, h_new, h)
            c_new = jnp.where(valid, c_new, c)
        return h_new, c_new

    h, c = lax.fori_loop(0, chunk, step, (h_sc[...], c_sc[...]),
                         unroll=unroll)
    h_sc[...] = h
    c_sc[...] = c

    @pl.when(ci == pl.num_programs(0) - 1)
    def _():
        out_ref[...] = (jnp.dot(h.astype(mm_dtype), whp_ref[...],
                                preferred_element_type=jnp.float32)
                        + bp_ref[...])


# --------------------------------------------------------------------------
# Wrapper
# --------------------------------------------------------------------------
def lstm_forward(x, params, *, num_hidden, num_classes, time_chunk=None,
                 matmul_dtype=jnp.bfloat16):
    """x: (B, T, D) float32.  Returns logits (B, num_classes) float32.

    matmul_dtype: dtype of MXU operands (weights / x / h at the dot).  bf16
    (default) for throughput; jnp.float32 for exact-match verification.
    Element-wise gate math and accumulation are always f32.
    """
    B, T, D = x.shape
    H, C = num_hidden, num_classes

    (W_xg, W_hg, b_g,
     W_xi, W_hi, b_i,
     W_xf, W_hf, b_f,
     W_xo, W_ho, b_o,
     W_hp, b_p) = params

    # padded (lane=128, f32 sublane=8) sizes
    Bp = _round_up(B, 8)
    Dp = _round_up(D, 128)
    Hp = _round_up(H, 128)
    Cp = _round_up(C, 128)
    H4 = 4 * Hp

    if time_chunk is None:
        # Tc*Bp >= 256 rows fills the 256-wide MXU on v6e/v7x for phase-1 work.
        time_chunk = min(T, 32)
    Tc = max(1, min(time_chunk, T))
    n_chunks = pl.cdiv(T, Tc)
    Tp = n_chunks * Tc

    def pad2(w, r, c, dtype):
        w = w.astype(dtype)
        return jnp.pad(w, ((0, r - w.shape[0]), (0, c - w.shape[1])))

    # fused, per-gate-padded weights (matmul dtype); biases stay f32
    W_x4 = jnp.concatenate([pad2(W_xg, Dp, Hp, matmul_dtype),
                            pad2(W_xi, Dp, Hp, matmul_dtype),
                            pad2(W_xf, Dp, Hp, matmul_dtype),
                            pad2(W_xo, Dp, Hp, matmul_dtype)], axis=1)
    W_h4 = jnp.concatenate([pad2(W_hg, Hp, Hp, matmul_dtype),
                            pad2(W_hi, Hp, Hp, matmul_dtype),
                            pad2(W_hf, Hp, Hp, matmul_dtype),
                            pad2(W_ho, Hp, Hp, matmul_dtype)], axis=1)
    b4 = jnp.concatenate([pad2(b_g, 1, Hp, jnp.float32),
                          pad2(b_i, 1, Hp, jnp.float32),
                          pad2(b_f, 1, Hp, jnp.float32),
                          pad2(b_o, 1, Hp, jnp.float32)], axis=1)
    W_hp_p = pad2(W_hp, Hp, Cp, matmul_dtype)
    b_p_p = pad2(b_p, 1, Cp, jnp.float32)

    # time-major, zero-padded input in matmul dtype: (Tp, Bp, Dp)
    x_tm = jnp.transpose(x, (1, 0, 2)).astype(matmul_dtype)
    x_tm = jnp.pad(x_tm, ((0, Tp - T), (0, Bp - B), (0, Dp - D)))

    # unroll cap: full unroll is fine for Hp<=256; larger Hp would overflow
    # the 64-vreg file and spill, so cap the unroll factor.
    unroll = Tc if Hp <= 256 else min(Tc, 8)

    # VMEM budget (double-buffered inputs + scratch), with headroom, capped at
    # v7x's 64 MiB physical VMEM.
    mm_bytes = jnp.dtype(matmul_dtype).itemsize
    vmem_est = (
        2 * Tc * Bp * Dp * mm_bytes                       # x chunk (dbl buf)
        + 2 * (Dp * H4 + Hp * H4 + Hp * Cp) * mm_bytes    # weights (dbl buf)
        + 2 * (H4 + Cp) * 4                               # biases
        + Tc * Bp * H4 * 4                                # XW scratch (f32)
        + 2 * Bp * Hp * 4                                 # h, c scratch
        + 2 * Bp * Cp * 4                                 # output (dbl buf)
    )
    vmem_limit = int(min(64 * 1024 * 1024,
                         max(32 * 1024 * 1024, 2 * vmem_est)))

    kernel = functools.partial(_lstm_fused_kernel,
                               hp=Hp, seq_len=T, chunk=Tc, unroll=unroll)

    out_p = pl.pallas_call(
        kernel,
        out_shape=jax.ShapeDtypeStruct((Bp, Cp), jnp.float32),
        grid_spec=pltpu.PrefetchScalarGridSpec(
            num_scalar_prefetch=0,
            grid=(n_chunks,),
            in_specs=[
                pl.BlockSpec((Tc, Bp, Dp), lambda t: (t, 0, 0)),   # x chunk
                pl.BlockSpec((Dp, H4), lambda t: (0, 0)),          # W_x4
                pl.BlockSpec((1, H4), lambda t: (0, 0)),           # b4
                pl.BlockSpec((Hp, H4), lambda t: (0, 0)),          # W_h4
                pl.BlockSpec((Hp, Cp), lambda t: (0, 0)),          # W_hp
                pl.BlockSpec((1, Cp), lambda t: (0, 0)),           # b_p
            ],
            out_specs=pl.BlockSpec((Bp, Cp), lambda t: (0, 0)),
            scratch_shapes=[
                pltpu.VMEM((Tc, Bp, H4), jnp.float32),   # XW chunk
                pltpu.VMEM((Bp, Hp), jnp.float32),       # h
                pltpu.VMEM((Bp, Hp), jnp.float32),       # c
            ],
        ),
        compiler_params=pltpu.CompilerParams(
            dimension_semantics=("arbitrary",),
            vmem_limit_bytes=vmem_limit),
    )(x_tm, W_x4, b4, W_h4, W_hp_p, b_p_p)

    return out_p[:B, :C]


# --------------------------------------------------------------------------
# Params / reference
# --------------------------------------------------------------------------
def init_params(key, input_dim, num_hidden, num_classes, std=0.01):
    ks = jax.random.split(key, 9)
    D, H, C = input_dim, num_hidden, num_classes
    nrm = lambda k, s: (std * jax.random.normal(k, s)).astype(jnp.float32)
    zrow = lambda n: jnp.zeros((1, n), jnp.float32)
    return (
        nrm(ks[0], (D, H)), nrm(ks[1], (H, H)), zrow(H),   # g
        nrm(ks[2], (D, H)), nrm(ks[3], (H, H)), zrow(H),   # i
        nrm(ks[4], (D, H)), nrm(ks[5], (H, H)), zrow(H),   # f
        nrm(ks[6], (D, H)), nrm(ks[7], (H, H)), zrow(H),   # o
        nrm(ks[8], (H, C)), zrow(C),                        # projection
    )


def lstm_reference(x, params):
    """Pure-JAX f32 reference mirroring the PyTorch forward
    (input_dim == num_classes path)."""
    (W_xg, W_hg, b_g, W_xi, W_hi, b_i,
     W_xf, W_hf, b_f, W_xo, W_ho, b_o, W_hp, b_p) = params
    B, T, D = x.shape
    H = W_hg.shape[0]
    h = jnp.zeros((B, H), jnp.float32)
    c = jnp.zeros((B, H), jnp.float32)
    for t in range(T):
        x_t = x[:, t, :]
        g = jnp.tanh(x_t @ W_xg + h @ W_hg + b_g)
        i = jax.nn.sigmoid(x_t @ W_xi + h @ W_hi + b_i)
        f = jax.nn.sigmoid(x_t @ W_xf + h @ W_hf + b_f)
        o = jax.nn.sigmoid(x_t @ W_xo + h @ W_ho + b_o)
        c = g * i + c * f
        h = jnp.tanh(c) * o
    return h @ W_hp + b_p


if __name__ == "__main__":
    # Small shapes consistent with the module (input_dim == num_classes branch).
    batch_size = 2
    seq_length = 8
    num_classes = 10
    input_dim = num_classes
    num_hidden = 32

    key = jax.random.PRNGKey(0)
    k_params, k_x = jax.random.split(key)

    params = init_params(k_params, input_dim, num_hidden, num_classes)
    x = jax.random.normal(k_x, (batch_size, seq_length, input_dim),
                          dtype=jnp.float32)

    ref = lstm_reference(x, params)

    # 1) f32-MXU path: exact semantics check vs. the f32 reference.
    out_f32 = lstm_forward(x, params, num_hidden=num_hidden,
                           num_classes=num_classes,
                           matmul_dtype=jnp.float32)
    out_f32 = jax.block_until_ready(out_f32)
    assert out_f32.shape == (batch_size, num_classes)
    assert jnp.allclose(out_f32, ref, atol=1e-5, rtol=1e-5), (
        float(jnp.max(jnp.abs(out_f32 - ref))))

    # 2) bf16-MXU path (default / perf config): looser tolerance.
    out_bf16 = lstm_forward(x, params, num_hidden=num_hidden,
                            num_classes=num_classes)
    out_bf16 = jax.block_until_ready(out_bf16)
    assert out_bf16.shape == (batch_size, num_classes)
    assert jnp.allclose(out_bf16, ref, atol=2e-2, rtol=2e-2), (
        float(jnp.max(jnp.abs(out_bf16 - ref))))

    print("KERNEL_OK")
</pallas_src>

<mosaic_0001>
module attributes {stable_mosaic.version = 11 : i64} {
  func.func @_lstm_fused_kernel(%arg0: i32, %arg1: memref<8x8x128xf32, #tpu.memory_space<vmem>>, %arg2: memref<128x512xf32, #tpu.memory_space<vmem>>, %arg3: memref<1x512xf32, #tpu.memory_space<vmem>>, %arg4: memref<128x512xf32, #tpu.memory_space<vmem>>, %arg5: memref<128x128xf32, #tpu.memory_space<vmem>>, %arg6: memref<1x128xf32, #tpu.memory_space<vmem>>, %arg7: memref<8x128xf32, #tpu.memory_space<vmem>>, %arg8: memref<8x8x512xf32, #tpu.memory_space<vmem>>, %arg9: memref<8x128xf32, #tpu.memory_space<vmem>>, %arg10: memref<8x128xf32, #tpu.memory_space<vmem>>) attributes {dimension_semantics = [#tpu.dimension_semantics<arbitrary>], iteration_bounds = array<i64: 1>, scalar_prefetch = 0 : i64, scratch_operands = 3 : i64, tpu.core_type = #tpu.core_type<tc>, window_params = [{transform_indices = @transform_0, window_bounds = array<i64: 8, 8, 128>}, {pipeline_mode = #tpu.pipeline_mode<synchronous>, transform_indices = @transform_1, window_bounds = array<i64: 128, 512>}, {pipeline_mode = #tpu.pipeline_mode<synchronous>, transform_indices = @transform_2, window_bounds = array<i64: 1, 512>}, {pipeline_mode = #tpu.pipeline_mode<synchronous>, transform_indices = @transform_3, window_bounds = array<i64: 128, 512>}, {pipeline_mode = #tpu.pipeline_mode<synchronous>, transform_indices = @transform_4, window_bounds = array<i64: 128, 128>}, {pipeline_mode = #tpu.pipeline_mode<synchronous>, transform_indices = @transform_5, window_bounds = array<i64: 1, 128>}, {pipeline_mode = #tpu.pipeline_mode<synchronous>, transform_indices = @transform_6, window_bounds = array<i64: 8, 128>}]} {
    %c0_i32 = arith.constant 0 : i32
    %0 = arith.cmpi eq, %arg0, %c0_i32 : i32
    %1 = arith.extui %0 : i1 to i32
    %c0_i32_0 = arith.constant 0 : i32
    %2 = arith.cmpi ne, %1, %c0_i32_0 : i32
    scf.if %2 {
      %cst_55 = arith.constant 0.000000e+00 : f32
      %188 = vector.broadcast %cst_55 : f32 to vector<8x128xf32>
      %c0_56 = arith.constant 0 : index
      %c0_57 = arith.constant 0 : index
      %189 = vector.load %arg9[%c0_56, %c0_57] : memref<8x128xf32, #tpu.memory_space<vmem>>, vector<8x128xf32>
      tpu.vector_store %arg9[%c0_56, %c0_57], %188 {strides = array<i32>} : memref<8x128xf32, #tpu.memory_space<vmem>>, vector<8x128xf32>,
      %cst_58 = arith.constant 0.000000e+00 : f32
      %190 = vector.broadcast %cst_58 : f32 to vector<8x128xf32>
      %c0_59 = arith.constant 0 : index
      %c0_60 = arith.constant 0 : index
      %191 = vector.load %arg10[%c0_59, %c0_60] : memref<8x128xf32, #tpu.memory_space<vmem>>, vector<8x128xf32>
      tpu.vector_store %arg10[%c0_59, %c0_60], %190 {strides = array<i32>} : memref<8x128xf32, #tpu.memory_space<vmem>>, vector<8x128xf32>,
    } else {
    }
    %c0 = arith.constant 0 : index
    %c0_1 = arith.constant 0 : index
    %c0_2 = arith.constant 0 : index
    %3 = vector.load %arg1[%c0, %c0_1, %c0_2] : memref<8x8x128xf32, #tpu.memory_space<vmem>>, vector<8x8x128xf32>
    %4 = vector.shape_cast %3 : vector<8x8x128xf32> to vector<64x128xf32>
    %c0_3 = arith.constant 0 : index
    %c0_4 = arith.constant 0 : index
    %5 = vector.load %arg2[%c0_3, %c0_4] : memref<128x512xf32, #tpu.memory_space<vmem>>, vector<128x512xf32>
    %cst = arith.constant dense<0.000000e+00> : vector<64x512xf32>
    %6 = tpu.matmul %4, %5, %cst {dimension_numbers = #tpu.dot_dimension_numbers<[1], [0], [0], [1], [0, 0, 1, 1], [], []>} : vector<64x128xf32>, vector<128x512xf32>, vector<64x512xf32> -> vector<64x512xf32>
    %c0_5 = arith.constant 0 : index
    %c0_6 = arith.constant 0 : index
    %7 = vector.load %arg3[%c0_5, %c0_6] : memref<1x512xf32, #tpu.memory_space<vmem>>, vector<1x512xf32>
    %8 = vector.broadcast %7 : vector<1x512xf32> to vector<64x512xf32>
    %9 = arith.addf %6, %8 : vector<64x512xf32>
    %10 = vector.shape_cast %9 : vector<64x512xf32> to vector<8x8x512xf32>
    %c0_7 = arith.constant 0 : index
    %c0_8 = arith.constant 0 : index
    %c0_9 = arith.constant 0 : index
    %11 = vector.load %arg8[%c0_7, %c0_8, %c0_9] : memref<8x8x512xf32, #tpu.memory_space<vmem>>, vector<8x8x512xf32>
    tpu.vector_store %arg8[%c0_7, %c0_8, %c0_9], %10 {strides = array<i32>} : memref<8x8x512xf32, #tpu.memory_space<vmem>>, vector<8x8x512xf32>,
    %c0_10 = arith.constant 0 : index
    %c0_11 = arith.constant 0 : index
    %12 = vector.load %arg4[%c0_10, %c0_11] : memref<128x512xf32, #tpu.memory_space<vmem>>, vector<128x512xf32>
    %c0_12 = arith.constant 0 : index
    %c0_13 = arith.constant 0 : index
    %13 = vector.load %arg9[%c0_12, %c0_13] : memref<8x128xf32, #tpu.memory_space<vmem>>, vector<8x128xf32>
    %c0_14 = arith.constant 0 : index
    %c0_15 = arith.constant 0 : index
    %14 = vector.load %arg10[%c0_14, %c0_15] : memref<8x128xf32, #tpu.memory_space<vmem>>, vector<8x128xf32>
    %c0_i32_16 = arith.constant 0 : i32
    %15 = arith.index_cast %c0_i32_16 : i32 to index
    %c0_17 = arith.constant 0 : index
    %c0_18 = arith.constant 0 : index
    %16 = vector.load %arg8[%15, %c0_17, %c0_18] : memref<8x8x512xf32, #tpu.memory_space<vmem>>, vector<1x8x512xf32>
    %17 = vector.shape_cast %16 : vector<1x8x512xf32> to vector<8x512xf32>
    %cst_19 = arith.constant dense<0.000000e+00> : vector<8x512xf32>
    %18 = tpu.matmul %13, %12, %cst_19 {dimension_numbers = #tpu.dot_dimension_numbers<[1], [0], [0], [1], [0, 0, 1, 1], [], []>} : vector<8x128xf32>, vector<128x512xf32>, vector<8x512xf32> -> vector<8x512xf32>
    %19 = arith.addf %17, %18 : vector<8x512xf32>
    %20 = vector.extract_strided_slice %19 {offsets = [0, 0], sizes = [8, 128], strides = [1, 1]} : vector<8x512xf32> to vector<8x128xf32>
    %21 = math.tanh %20 : vector<8x128xf32>
    %22 = vector.extract_strided_slice %19 {offsets = [0, 128], sizes = [8, 384], strides = [1, 1]} : vector<8x512xf32> to vector<8x384xf32>
    %23 = arith.negf %22 : vector<8x384xf32>
    %24 = math.exp %23 : vector<8x384xf32>
    %cst_20 = arith.constant 1.000000e+00 : f32
    %25 = vector.broadcast %cst_20 : f32 to vector<8x384xf32>
    %26 = arith.addf %25, %24 : vector<8x384xf32>
    %27 = arith.divf %25, %26 : vector<8x384xf32>
    %28 = vector.extract_strided_slice %27 {offsets = [0, 0], sizes = [8, 128], strides = [1, 1]} : vector<8x384xf32> to vector<8x128xf32>
    %29 = vector.extract_strided_slice %27 {offsets = [0, 128], sizes = [8, 128], strides = [1, 1]} : vector<8x384xf32> to vector<8x128xf32>
    %30 = vector.extract_strided_slice %27 {offsets = [0, 256], sizes = [8, 128], strides = [1, 1]} : vector<8x384xf32> to vector<8x128xf32>
    %31 = arith.mulf %21, %28 : vector<8x128xf32>
    %32 = arith.mulf %14, %29 : vector<8x128xf32>
    %33 = arith.addf %31, %32 : vector<8x128xf32>
    %34 = math.tanh %33 : vector<8x128xf32>
    %35 = arith.mulf %34, %30 : vector<8x128xf32>
    %c1_i32 = arith.constant 1 : i32
    %36 = arith.index_cast %c1_i32 : i32 to index
    %c0_21 = arith.constant 0 : index
    %c0_22 = arith.constant 0 : index
    %37 = vector.load %arg8[%36, %c0_21, %c0_22] : memref<8x8x512xf32, #tpu.memory_space<vmem>>, vector<1x8x512xf32>
    %38 = vector.shape_cast %37 : vector<1x8x512xf32> to vector<8x512xf32>
    %cst_23 = arith.constant dense<0.000000e+00> : vector<8x512xf32>
    %39 = tpu.matmul %35, %12, %cst_23 {dimension_numbers = #tpu.dot_dimension_numbers<[1], [0], [0], [1], [0, 0, 1, 1], [], []>} : vector<8x128xf32>, vector<128x512xf32>, vector<8x512xf32> -> vector<8x512xf32>
    %40 = arith.addf %38, %39 : vector<8x512xf32>
    %41 = vector.extract_strided_slice %40 {offsets = [0, 0], sizes = [8, 128], strides = [1, 1]} : vector<8x512xf32> to vector<8x128xf32>
    %42 = math.tanh %41 : vector<8x128xf32>
    %43 = vector.extract_strided_slice %40 {offsets = [0, 128], sizes = [8, 384], strides = [1, 1]} : vector<8x512xf32> to vector<8x384xf32>
    %44 = arith.negf %43 : vector<8x384xf32>
    %45 = math.exp %44 : vector<8x384xf32>
    %cst_24 = arith.constant 1.000000e+00 : f32
    %46 = vector.broadcast %cst_24 : f32 to vector<8x384xf32>
    %47 = arith.addf %46, %45 : vector<8x384xf32>
    %48 = arith.divf %46, %47 : vector<8x384xf32>
    %49 = vector.extract_strided_slice %48 {offsets = [0, 0], sizes = [8, 128], strides = [1, 1]} : vector<8x384xf32> to vector<8x128xf32>
    %50 = vector.extract_strided_slice %48 {offsets = [0, 128], sizes = [8, 128], strides = [1, 1]} : vector<8x384xf32> to vector<8x128xf32>
    %51 = vector.extract_strided_slice %48 {offsets = [0, 256], sizes = [8, 128], strides = [1, 1]} : vector<8x384xf32> to vector<8x128xf32>
    %52 = arith.mulf %42, %49 : vector<8x128xf32>
    %53 = arith.mulf %33, %50 : vector<8x128xf32>
    %54 = arith.addf %52, %53 : vector<8x128xf32>
    %55 = math.tanh %54 : vector<8x128xf32>
    %56 = arith.mulf %55, %51 : vector<8x128xf32>
    %c2_i32 = arith.constant 2 : i32
    %57 = arith.index_cast %c2_i32 : i32 to index
    %c0_25 = arith.constant 0 : index
    %c0_26 = arith.constant 0 : index
    %58 = vector.load %arg8[%57, %c0_25, %c0_26] : memref<8x8x512xf32, #tpu.memory_space<vmem>>, vector<1x8x512xf32>
    %59 = vector.shape_cast %58 : vector<1x8x512xf32> to vector<8x512xf32>
    %cst_27 = arith.constant dense<0.000000e+00> : vector<8x512xf32>
    %60 = tpu.matmul %56, %12, %cst_27 {dimension_numbers = #tpu.dot_dimension_numbers<[1], [0], [0], [1], [0, 0, 1, 1], [], []>} : vector<8x128xf32>, vector<128x512xf32>, vector<8x512xf32> -> vector<8x512xf32>
    %61 = arith.addf %59, %60 : vector<8x512xf32>
    %62 = vector.extract_strided_slice %61 {offsets = [0, 0], sizes = [8, 128], strides = [1, 1]} : vector<8x512xf32> to vector<8x128xf32>
    %63 = math.tanh %62 : vector<8x128xf32>
    %64 = vector.extract_strided_slice %61 {offsets = [0, 128], sizes = [8, 384], strides = [1, 1]} : vector<8x512xf32> to vector<8x384xf32>
    %65 = arith.negf %64 : vector<8x384xf32>
    %66 = math.exp %65 : vector<8x384xf32>
    %cst_28 = arith.constant 1.000000e+00 : f32
    %67 = vector.broadcast %cst_28 : f32 to vector<8x384xf32>
    %68 = arith.addf %67, %66 : vector<8x384xf32>
    %69 = arith.divf %67, %68 : vector<8x384xf32>
    %70 = vector.extract_strided_slice %69 {offsets = [0, 0], sizes = [8, 128], strides = [1, 1]} : vector<8x384xf32> to vector<8x128xf32>
    %71 = vector.extract_strided_slice %69 {offsets = [0, 128], sizes = [8, 128], strides = [1, 1]} : vector<8x384xf32> to vector<8x128xf32>
    %72 = vector.extract_strided_slice %69 {offsets = [0, 256], sizes = [8, 128], strides = [1, 1]} : vector<8x384xf32> to vector<8x128xf32>
    %73 = arith.mulf %63, %70 : vector<8x128xf32>
    %74 = arith.mulf %54, %71 : vector<8x128xf32>
    %75 = arith.addf %73, %74 : vector<8x128xf32>
    %76 = math.tanh %75 : vector<8x128xf32>
    %77 = arith.mulf %76, %72 : vector<8x128xf32>
    %c3_i32 = arith.constant 3 : i32
    %78 = arith.index_cast %c3_i32 : i32 to index
    %c0_29 = arith.constant 0 : index
    %c0_30 = arith.constant 0 : index
    %79 = vector.load %arg8[%78, %c0_29, %c0_30] : memref<8x8x512xf32, #tpu.memory_space<vmem>>, vector<1x8x512xf32>
    %80 = vector.shape_cast %79 : vector<1x8x512xf32> to vector<8x512xf32>
    %cst_31 = arith.constant dense<0.000000e+00> : vector<8x512xf32>
    %81 = tpu.matmul %77, %12, %cst_31 {dimension_numbers = #tpu.dot_dimension_numbers<[1], [0], [0], [1], [0, 0, 1, 1], [], []>} : vector<8x128xf32>, vector<128x512xf32>, vector<8x512xf32> -> vector<8x512xf32>
    %82 = arith.addf %80, %81 : vector<8x512xf32>
    %83 = vector.extract_strided_slice %82 {offsets = [0, 0], sizes = [8, 128], strides = [1, 1]} : vector<8x512xf32> to vector<8x128xf32>
    %84 = math.tanh %83 : vector<8x128xf32>
    %85 = vector.extract_strided_slice %82 {offsets = [0, 128], sizes = [8, 384], strides = [1, 1]} : vector<8x512xf32> to vector<8x384xf32>
    %86 = arith.negf %85 : vector<8x384xf32>
    %87 = math.exp %86 : vector<8x384xf32>
    %cst_32 = arith.constant 1.000000e+00 : f32
    %88 = vector.broadcast %cst_32 : f32 to vector<8x384xf32>
    %89 = arith.addf %88, %87 : vector<8x384xf32>
    %90 = arith.divf %88, %89 : vector<8x384xf32>
    %91 = vector.extract_strided_slice %90 {offsets = [0, 0], sizes = [8, 128], strides = [1, 1]} : vector<8x384xf32> to vector<8x128xf32>
    %92 = vector.extract_strided_slice %90 {offsets = [0, 128], sizes = [8, 128], strides = [1, 1]} : vector<8x384xf32> to vector<8x128xf32>
    %93 = vector.extract_strided_slice %90 {offsets = [0, 256], sizes = [8, 128], strides = [1, 1]} : vector<8x384xf32> to vector<8x128xf32>
    %94 = arith.mulf %84, %91 : vector<8x128xf32>
    %95 = arith.mulf %75, %92 : vector<8x128xf32>
    %96 = arith.addf %94, %95 : vector<8x128xf32>
    %97 = math.tanh %96 : vector<8x128xf32>
    %98 = arith.mulf %97, %93 : vector<8x128xf32>
    %c4_i32 = arith.constant 4 : i32
    %99 = arith.index_cast %c4_i32 : i32 to index
    %c0_33 = arith.constant 0 : index
    %c0_34 = arith.constant 0 : index
    %100 = vector.load %arg8[%99, %c0_33, %c0_34] : memref<8x8x512xf32, #tpu.memory_space<vmem>>, vector<1x8x512xf32>
    %101 = vector.shape_cast %100 : vector<1x8x512xf32> to vector<8x512xf32>
    %cst_35 = arith.constant dense<0.000000e+00> : vector<8x512xf32>
    %102 = tpu.matmul %98, %12, %cst_35 {dimension_numbers = #tpu.dot_dimension_numbers<[1], [0], [0], [1], [0, 0, 1, 1], [], []>} : vector<8x128xf32>, vector<128x512xf32>, vector<8x512xf32> -> vector<8x512xf32>
    %103 = arith.addf %101, %102 : vector<8x512xf32>
    %104 = vector.extract_strided_slice %103 {offsets = [0, 0], sizes = [8, 128], strides = [1, 1]} : vector<8x512xf32> to vector<8x128xf32>
    %105 = math.tanh %104 : vector<8x128xf32>
    %106 = vector.extract_strided_slice %103 {offsets = [0, 128], sizes = [8, 384], strides = [1, 1]} : vector<8x512xf32> to vector<8x384xf32>
    %107 = arith.negf %106 : vector<8x384xf32>
    %108 = math.exp %107 : vector<8x384xf32>
    %cst_36 = arith.constant 1.000000e+00 : f32
    %109 = vector.broadcast %cst_36 : f32 to vector<8x384xf32>
    %110 = arith.addf %109, %108 : vector<8x384xf32>
    %111 = arith.divf %109, %110 : vector<8x384xf32>
    %112 = vector.extract_strided_slice %111 {offsets = [0, 0], sizes = [8, 128], strides = [1, 1]} : vector<8x384xf32> to vector<8x128xf32>
    %113 = vector.extract_strided_slice %111 {offsets = [0, 128], sizes = [8, 128], strides = [1, 1]} : vector<8x384xf32> to vector<8x128xf32>
    %114 = vector.extract_strided_slice %111 {offsets = [0, 256], sizes = [8, 128], strides = [1, 1]} : vector<8x384xf32> to vector<8x128xf32>
    %115 = arith.mulf %105, %112 : vector<8x128xf32>
    %116 = arith.mulf %96, %113 : vector<8x128xf32>
    %117 = arith.addf %115, %116 : vector<8x128xf32>
    %118 = math.tanh %117 : vector<8x128xf32>
    %119 = arith.mulf %118, %114 : vector<8x128xf32>
    %c5_i32 = arith.constant 5 : i32
    %120 = arith.index_cast %c5_i32 : i32 to index
    %c0_37 = arith.constant 0 : index
    %c0_38 = arith.constant 0 : index
    %121 = vector.load %arg8[%120, %c0_37, %c0_38] : memref<8x8x512xf32, #tpu.memory_space<vmem>>, vector<1x8x512xf32>
    %122 = vector.shape_cast %121 : vector<1x8x512xf32> to vector<8x512xf32>
    %cst_39 = arith.constant dense<0.000000e+00> : vector<8x512xf32>
    %123 = tpu.matmul %119, %12, %cst_39 {dimension_numbers = #tpu.dot_dimension_numbers<[1], [0], [0], [1], [0, 0, 1, 1], [], []>} : vector<8x128xf32>, vector<128x512xf32>, vector<8x512xf32> -> vector<8x512xf32>
    %124 = arith.addf %122, %123 : vector<8x512xf32>
    %125 = vector.extract_strided_slice %124 {offsets = [0, 0], sizes = [8, 128], strides = [1, 1]} : vector<8x512xf32> to vector<8x128xf32>
    %126 = math.tanh %125 : vector<8x128xf32>
    %127 = vector.extract_strided_slice %124 {offsets = [0, 128], sizes = [8, 384], strides = [1, 1]} : vector<8x512xf32> to vector<8x384xf32>
    %128 = arith.negf %127 : vector<8x384xf32>
    %129 = math.exp %128 : vector<8x384xf32>
    %cst_40 = arith.constant 1.000000e+00 : f32
    %130 = vector.broadcast %cst_40 : f32 to vector<8x384xf32>
    %131 = arith.addf %130, %129 : vector<8x384xf32>
    %132 = arith.divf %130, %131 : vector<8x384xf32>
    %133 = vector.extract_strided_slice %132 {offsets = [0, 0], sizes = [8, 128], strides = [1, 1]} : vector<8x384xf32> to vector<8x128xf32>
    %134 = vector.extract_strided_slice %132 {offsets = [0, 128], sizes = [8, 128], strides = [1, 1]} : vector<8x384xf32> to vector<8x128xf32>
    %135 = vector.extract_strided_slice %132 {offsets = [0, 256], sizes = [8, 128], strides = [1, 1]} : vector<8x384xf32> to vector<8x128xf32>
    %136 = arith.mulf %126, %133 : vector<8x128xf32>
    %137 = arith.mulf %117, %134 : vector<8x128xf32>
    %138 = arith.addf %136, %137 : vector<8x128xf32>
    %139 = math.tanh %138 : vector<8x128xf32>
    %140 = arith.mulf %139, %135 : vector<8x128xf32>
    %c6_i32 = arith.constant 6 : i32
    %141 = arith.index_cast %c6_i32 : i32 to index
    %c0_41 = arith.constant 0 : index
    %c0_42 = arith.constant 0 : index
    %142 = vector.load %arg8[%141, %c0_41, %c0_42] : memref<8x8x512xf32, #tpu.memory_space<vmem>>, vector<1x8x512xf32>
    %143 = vector.shape_cast %142 : vector<1x8x512xf32> to vector<8x512xf32>
    %cst_43 = arith.constant dense<0.000000e+00> : vector<8x512xf32>
    %144 = tpu.matmul %140, %12, %cst_43 {dimension_numbers = #tpu.dot_dimension_numbers<[1], [0], [0], [1], [0, 0, 1, 1], [], []>} : vector<8x128xf32>, vector<128x512xf32>, vector<8x512xf32> -> vector<8x512xf32>
    %145 = arith.addf %143, %144 : vector<8x512xf32>
    %146 = vector.extract_strided_slice %145 {offsets = [0, 0], sizes = [8, 128], strides = [1, 1]} : vector<8x512xf32> to vector<8x128xf32>
    %147 = math.tanh %146 : vector<8x128xf32>
    %148 = vector.extract_strided_slice %145 {offsets = [0, 128], sizes = [8, 384], strides = [1, 1]} : vector<8x512xf32> to vector<8x384xf32>
    %149 = arith.negf %148 : vector<8x384xf32>
    %150 = math.exp %149 : vector<8x384xf32>
    %cst_44 = arith.constant 1.000000e+00 : f32
    %151 = vector.broadcast %cst_44 : f32 to vector<8x384xf32>
    %152 = arith.addf %151, %150 : vector<8x384xf32>
    %153 = arith.divf %151, %152 : vector<8x384xf32>
    %154 = vector.extract_strided_slice %153 {offsets = [0, 0], sizes = [8, 128], strides = [1, 1]} : vector<8x384xf32> to vector<8x128xf32>
    %155 = vector.extract_strided_slice %153 {offsets = [0, 128], sizes = [8, 128], strides = [1, 1]} : vector<8x384xf32> to vector<8x128xf32>
    %156 = vector.extract_strided_slice %153 {offsets = [0, 256], sizes = [8, 128], strides = [1, 1]} : vector<8x384xf32> to vector<8x128xf32>
    %157 = arith.mulf %147, %154 : vector<8x128xf32>
    %158 = arith.mulf %138, %155 : vector<8x128xf32>
    %159 = arith.addf %157, %158 : vector<8x128xf32>
    %160 = math.tanh %159 : vector<8x128xf32>
    %161 = arith.mulf %160, %156 : vector<8x128xf32>
    %c7_i32 = arith.constant 7 : i32
    %162 = arith.index_cast %c7_i32 : i32 to index
    %c0_45 = arith.constant 0 : index
    %c0_46 = arith.constant 0 : index
    %163 = vector.load %arg8[%162, %c0_45, %c0_46] : memref<8x8x512xf32, #tpu.memory_space<vmem>>, vector<1x8x512xf32>
    %164 = vector.shape_cast %163 : vector<1x8x512xf32> to vector<8x512xf32>
    %cst_47 = arith.constant dense<0.000000e+00> : vector<8x512xf32>
    %165 = tpu.matmul %161, %12, %cst_47 {dimension_numbers = #tpu.dot_dimension_numbers<[1], [0], [0], [1], [0, 0, 1, 1], [], []>} : vector<8x128xf32>, vector<128x512xf32>, vector<8x512xf32> -> vector<8x512xf32>
    %166 = arith.addf %164, %165 : vector<8x512xf32>
    %167 = vector.extract_strided_slice %166 {offsets = [0, 0], sizes = [8, 128], strides = [1, 1]} : vector<8x512xf32> to vector<8x128xf32>
    %168 = math.tanh %167 : vector<8x128xf32>
    %169 = vector.extract_strided_slice %166 {offsets = [0, 128], sizes = [8, 384], strides = [1, 1]} : vector<8x512xf32> to vector<8x384xf32>
    %170 = arith.negf %169 : vector<8x384xf32>
    %171 = math.exp %170 : vector<8x384xf32>
    %cst_48 = arith.constant 1.000000e+00 : f32
    %172 = vector.broadcast %cst_48 : f32 to vector<8x384xf32>
    %173 = arith.addf %172, %171 : vector<8x384xf32>
    %174 = arith.divf %172, %173 : vector<8x384xf32>
    %175 = vector.extract_strided_slice %174 {offsets = [0, 0], sizes = [8, 128], strides = [1, 1]} : vector<8x384xf32> to vector<8x128xf32>
    %176 = vector.extract_strided_slice %174 {offsets = [0, 128], sizes = [8, 128], strides = [1, 1]} : vector<8x384xf32> to vector<8x128xf32>
    %177 = vector.extract_strided_slice %174 {offsets = [0, 256], sizes = [8, 128], strides = [1, 1]} : vector<8x384xf32> to vector<8x128xf32>
    %178 = arith.mulf %168, %175 : vector<8x128xf32>
    %179 = arith.mulf %159, %176 : vector<8x128xf32>
    %180 = arith.addf %178, %179 : vector<8x128xf32>
    %181 = math.tanh %180 : vector<8x128xf32>
    %182 = arith.mulf %181, %177 : vector<8x128xf32>
    %c8_i32 = arith.constant 8 : i32
    %c0_49 = arith.constant 0 : index
    %c0_50 = arith.constant 0 : index
    %183 = vector.load %arg9[%c0_49, %c0_50] : memref<8x128xf32, #tpu.memory_space<vmem>>, vector<8x128xf32>
    tpu.vector_store %arg9[%c0_49, %c0_50], %182 {strides = array<i32>} : memref<8x128xf32, #tpu.memory_space<vmem>>, vector<8x128xf32>,
    %c0_51 = arith.constant 0 : index
    %c0_52 = arith.constant 0 : index
    %184 = vector.load %arg10[%c0_51, %c0_52] : memref<8x128xf32, #tpu.memory_space<vmem>>, vector<8x128xf32>
    tpu.vector_store %arg10[%c0_51, %c0_52], %180 {strides = array<i32>} : memref<8x128xf32, #tpu.memory_space<vmem>>, vector<8x128xf32>,
    %c0_i32_53 = arith.constant 0 : i32
    %185 = arith.cmpi eq, %arg0, %c0_i32_53 : i32
    %186 = arith.extui %185 : i1 to i32
    %c0_i32_54 = arith.constant 0 : i32
    %187 = arith.cmpi ne, %186, %c0_i32_54 : i32
    scf.if %187 {
      %c0_55 = arith.constant 0 : index
      %c0_56 = arith.constant 0 : index
      %188 = vector.load %arg5[%c0_55, %c0_56] : memref<128x128xf32, #tpu.memory_space<vmem>>, vector<128x128xf32>
      %cst_57 = arith.constant dense<0.000000e+00> : vector<8x128xf32>
      %189 = tpu.matmul %182, %188, %cst_57 {dimension_numbers = #tpu.dot_dimension_numbers<[1], [0], [0], [1], [0, 0, 1, 1], [], []>} : vector<8x128xf32>, vector<128x128xf32>, vector<8x128xf32> -> vector<8x128xf32>
      %c0_58 = arith.constant 0 : index
      %c0_59 = arith.constant 0 : index
      %190 = vector.load %arg6[%c0_58, %c0_59] : memref<1x128xf32, #tpu.memory_space<vmem>>, vector<1x128xf32>
      %191 = vector.broadcast %190 : vector<1x128xf32> to vector<8x128xf32>
      %192 = arith.addf %189, %191 : vector<8x128xf32>
      %c0_60 = arith.constant 0 : index
      %c0_61 = arith.constant 0 : index
      %193 = vector.load %arg7[%c0_60, %c0_61] : memref<8x128xf32, #tpu.memory_space<vmem>>, vector<8x128xf32>
      tpu.vector_store %arg7[%c0_60, %c0_61], %192 {strides = array<i32>} : memref<8x128xf32, #tpu.memory_space<vmem>>, vector<8x128xf32>,
    } else {
    }
    return
  }
  func.func @transform_0(%arg0: i32) -> (i32, i32, i32) {
    %c0_i32 = arith.constant 0 : i32
    %c0_i32_0 = arith.constant 0 : i32
    %c0_i32_1 = arith.constant 0 : i32
    return %arg0, %c0_i32, %c0_i32_0 : i32, i32, i32
  }
  func.func @transform_1(%arg0: i32) -> (i32, i32) {
    %c0_i32 = arith.constant 0 : i32
    %c0_i32_0 = arith.constant 0 : i32
    %c0_i32_1 = arith.constant 0 : i32
    return %c0_i32, %c0_i32_0 : i32, i32
  }
  func.func @transform_2(%arg0: i32) -> (i32, i32) {
    %c0_i32 = arith.constant 0 : i32
    %c0_i32_0 = arith.constant 0 : i32
    %c0_i32_1 = arith.constant 0 : i32
    return %c0_i32, %c0_i32_0 : i32, i32
  }
  func.func @transform_3(%arg0: i32) -> (i32, i32) {
    %c0_i32 = arith.constant 0 : i32
    %c0_i32_0 = arith.constant 0 : i32
    %c0_i32_1 = arith.constant 0 : i32
    return %c0_i32, %c0_i32_0 : i32, i32
  }
  func.func @transform_4(%arg0: i32) -> (i32, i32) {
    %c0_i32 = arith.constant 0 : i32
    %c0_i32_0 = arith.constant 0 : i32
    %c0_i32_1 = arith.constant 0 : i32
    return %c0_i32, %c0_i32_0 : i32, i32
  }
  func.func @transform_5(%arg0: i32) -> (i32, i32) {
    %c0_i32 = arith.constant 0 : i32
    %c0_i32_0 = arith.constant 0 : i32
    %c0_i32_1 = arith.constant 0 : i32
    return %c0_i32, %c0_i32_0 : i32, i32
  }
  func.func @transform_6(%arg0: i32) -> (i32, i32) {
    %c0_i32 = arith.constant 0 : i32
    %c0_i32_0 = arith.constant 0 : i32
    %c0_i32_1 = arith.constant 0 : i32
    return %c0_i32, %c0_i32_0 : i32, i32
  }
}

</mosaic_0001>

<llo_original>
// kernel: tpu_custom_call.1
$region0: #{tpu_custom_call.1}
  #allocation0 [shape = 'u32[]', space=smem, size = 0x4, offset = 0x4, fixed_abs, tag = 'smem constant byte address 0x4 - core index']
  #allocation1 [shape = 'u32[144,128]{1,0:T(1,128)}', space=vmem, size = 0x12000, scoped, tag = 'internal scratch']
  #allocation2 [shape = 'f32[8,8,512]{2,1,0:T(8,128)}', space=vmem, size = 0x20000, scoped, tag = 'scratch operand']
  #allocation3 [shape = 'f32[8,128]{1,0:T(8,128)}', space=vmem, size = 0x1000, scoped, tag = 'scratch operand']
  #allocation4 [shape = 'f32[8,128]{1,0:T(8,128)}', space=vmem, size = 0x1000, scoped, tag = 'scratch operand']
  %s0 = inlined_call_operand.hbm [shape: f32[8,8,128], index: 0, kind: input, shape index: {}]
  %s1 = inlined_call_operand.hbm [shape: f32[128,512], index: 1, kind: input, shape index: {}]
  %s2 = inlined_call_operand.vmem [shape: f32[1,512], index: 2, kind: input, shape index: {}]
  %s3 = inlined_call_operand.hbm [shape: f32[128,512], index: 3, kind: input, shape index: {}]
  %s4 = inlined_call_operand.hbm [shape: f32[128,128], index: 4, kind: input, shape index: {}]
  %s5 = inlined_call_operand.vmem [shape: f32[1,128], index: 5, kind: input, shape index: {}]
  %s6 = inlined_call_operand.hbm [shape: f32[8,128], index: 6, kind: output, shape index: {}]
  %s7 = sld [smem:[#allocation0]]
  $region58: #{tpu_custom_call.1} parent=0
    _
  %s9 = ssub.s32 1, %s7
  %s10 = scalar_select 0, %s9, %s7
  $region1: #{tpu_custom_call.1} parent=0
    #allocation5 [shape = 'u8[32768]{0}', space=vmem, size = 0x8000, scoped, tag = 'input window, operand 0, single buffered']
    #allocation6 [shape = 's32[1]{0}', space=sflag, size = 0x4, scoped, tag = 'scoped memory for tpu_custom_call.1']
    #allocation7 [shape = 's32[1]{0}', space=sflag, size = 0x4, scoped, tag = 'scoped memory for tpu_custom_call.1']
    #allocation8 [shape = 'u8[262144]{0}', space=vmem, size = 0x40000, scoped, tag = 'input window, operand 1, single buffered']
    #allocation9 [shape = 's32[1]{0}', space=sflag, size = 0x4, scoped, tag = 'scoped memory for tpu_custom_call.1']
    #allocation10 [shape = 'u8[262144]{0}', space=vmem, size = 0x40000, scoped, tag = 'input window, operand 3, single buffered']
    #allocation11 [shape = 'u8[65536]{0}', space=vmem, size = 0x10000, scoped, tag = 'input window, operand 4, single buffered']
    #allocation12 [shape = 's32[1]{0}', space=sflag, size = 0x4, scoped, tag = 'scoped memory for tpu_custom_call.1']
    #allocation13 [shape = 'u8[4096]{0}', space=vmem, size = 0x1000, scoped, tag = 'output window, operand 0, single buffered']
    %11 = vsyncpa [#allocation6], 0
    %12 = vsyncpa [#allocation9], 0
    %13 = vsyncpa [#allocation12], 0
    %14 = vsyncpa [#allocation7], 0
    // Predicated region
    $region2: #{tpu_custom_call.1} parent=1 // pred_check
      _
    $region3: #{tpu_custom_call.1} parent=1 // pred_check_branch
      %16 = sbr.rel (0) target = $region5
    $region4: #{tpu_custom_call.1} parent=1 // pred_region
      %s18 = ssub.s32 1024, 1024
      %19 = vsyncadd [#allocation6], %s18
      %s20 = sshll.u32 [#allocation5], 4
      %s21 = int_to_ptr.vmem [resolvable:$true] %s20
      %26 = dma.hbm_to_vmem [thread:$0]  %s0, 1024, %s21, [#allocation6], 128, 128, 8
    $region5: #{tpu_custom_call.1} parent=1 // pred_fallthru
      _
    // Predicated region
    $region6: #{tpu_custom_call.1} parent=1 // pred_check
      _
    $region7: #{tpu_custom_call.1} parent=1 // pred_check_branch
      %28 = sbr.rel (0) target = $region9
    $region8: #{tpu_custom_call.1} parent=1 // pred_region
      %s30 = ssub.s32 8192, 8192
      %31 = vsyncadd [#allocation9], %s30
      %s32 = sshll.u32 [#allocation8], 4
      %s33 = int_to_ptr.vmem [resolvable:$true] %s32
      %38 = dma.hbm_to_vmem [thread:$0]  %s1, 8192, %s33, [#allocation9], 512, 512, 32
    $region9: #{tpu_custom_call.1} parent=1 // pred_fallthru
      _
    // Predicated region
    $region10: #{tpu_custom_call.1} parent=1 // pred_check
      _
    $region11: #{tpu_custom_call.1} parent=1 // pred_check_branch
      %40 = sbr.rel (0) target = $region13
    $region12: #{tpu_custom_call.1} parent=1 // pred_region
      _
    $region13: #{tpu_custom_call.1} parent=1 // pred_fallthru
      _
    // Predicated region
    $region14: #{tpu_custom_call.1} parent=1 // pred_check
      _
    $region15: #{tpu_custom_call.1} parent=1 // pred_check_branch
      %42 = sbr.rel (0) target = $region17
    $region16: #{tpu_custom_call.1} parent=1 // pred_region
      %s44 = ssub.s32 8192, 8192
      %45 = vsyncadd [#allocation9], %s44
      %s46 = sshll.u32 [#allocation10], 4
      %s47 = int_to_ptr.vmem [resolvable:$true] %s46
      %52 = dma.hbm_to_vmem [thread:$0]  %s3, 8192, %s47, [#allocation9], 512, 512, 32
    $region17: #{tpu_custom_call.1} parent=1 // pred_fallthru
      _
    // Predicated region
    $region18: #{tpu_custom_call.1} parent=1 // pred_check
      _
    $region19: #{tpu_custom_call.1} parent=1 // pred_check_branch
      %54 = sbr.rel (0) target = $region21
    $region20: #{tpu_custom_call.1} parent=1 // pred_region
      %s56 = ssub.s32 2048, 2048
      %57 = vsyncadd [#allocation12], %s56
      %s58 = sshll.u32 [#allocation11], 4
      %s59 = int_to_ptr.vmem [resolvable:$true] %s58
      %64 = dma.hbm_to_vmem [thread:$0]  %s4, 2048, %s59, [#allocation12], 128, 128, 8
    $region21: #{tpu_custom_call.1} parent=1 // pred_fallthru
      _
    // Predicated region
    $region22: #{tpu_custom_call.1} parent=1 // pred_check
      _
    $region23: #{tpu_custom_call.1} parent=1 // pred_check_branch
      %66 = sbr.rel (0) target = $region25
    $region24: #{tpu_custom_call.1} parent=1 // pred_region
      _
    $region25: #{tpu_custom_call.1} parent=1 // pred_fallthru
      _
    // Predicated region
    $region26: #{tpu_custom_call.1} parent=1 // pred_check
      _
    $region27: #{tpu_custom_call.1} parent=1 // pred_check_branch
      %68 = sbr.rel (0) target = $region29
    $region28: #{tpu_custom_call.1} parent=1 // pred_region
      %69 = dma.done [#allocation6], 1024
    $region29: #{tpu_custom_call.1} parent=1 // pred_fallthru
      _
    // Predicated region
    $region30: #{tpu_custom_call.1} parent=1 // pred_check
      _
    $region31: #{tpu_custom_call.1} parent=1 // pred_check_branch
      %71 = sbr.rel (0) target = $region33
    $region32: #{tpu_custom_call.1} parent=1 // pred_region
      %72 = dma.done [#allocation9], 8192
    $region33: #{tpu_custom_call.1} parent=1 // pred_fallthru
      _
    // Predicated region
    $region34: #{tpu_custom_call.1} parent=1 // pred_check
      _
    $region35: #{tpu_custom_call.1} parent=1 // pred_check_branch
      %74 = sbr.rel (0) target = $region37
    $region36: #{tpu_custom_call.1} parent=1 // pred_region
      %75 = dma.done [#allocation9], 8192
    $region37: #{tpu_custom_call.1} parent=1 // pred_fallthru
      _
    // Predicated region
    $region38: #{tpu_custom_call.1} parent=1 // pred_check
      _
    $region39: #{tpu_custom_call.1} parent=1 // pred_check_branch
      %77 = sbr.rel (0) target = $region41
    $region40: #{tpu_custom_call.1} parent=1 // pred_region
      %78 = dma.done [#allocation12], 2048
    $region41: #{tpu_custom_call.1} parent=1 // pred_fallthru
      _
    %p79 = scmp.eq.s32.totalorder 0, 0
    // Predicated region
    $region42: #{tpu_custom_call.1} parent=1 // pred_check
      %p80 = pneg %p79
    $region43: #{tpu_custom_call.1} parent=1 // pred_check_branch
      %82 = sbr.rel (%p80) target = $region45
    $region44: #{tpu_custom_call.1} parent=1 // pred_region
      %83 = vst [vmem:[#allocation3] sm:$0xff] 0.0
      %84 = vst [vmem:[#allocation4] sm:$0xff] 0.0
    $region45: #{tpu_custom_call.1} parent=1 // pred_fallthru
      _
    %v85 = vld [vmem:[#allocation5] sm:$0xff]
    %v86 = vld [vmem:[#allocation5 + $0x8] sm:$0xff]
    %v87 = vld [vmem:[#allocation5 + $0x10] sm:$0xff]
    %v88 = vld [vmem:[#allocation5 + $0x18] sm:$0xff]
    %v89 = vld [vmem:[#allocation5 + $0x20] sm:$0xff]
    %v90 = vld [vmem:[#allocation5 + $0x28] sm:$0xff]
    %v91 = vld [vmem:[#allocation5 + $0x30] sm:$0xff]
    %v92 = vld [vmem:[#allocation5 + $0x38] sm:$0xff]
    %v93 = vld [vmem:[#allocation8] sm:$0xff]
    %v94 = vld [vmem:[#allocation8 + $0x8] sm:$0xff]
    %v95 = vld [vmem:[#allocation8 + $0x10] sm:$0xff]
    %v96 = vld [vmem:[#allocation8 + $0x18] sm:$0xff]
    %v97 = vld [vmem:[#allocation8 + $0x20] sm:$0xff]
    %v98 = vld [vmem:[#allocation8 + $0x28] sm:$0xff]
    %v99 = vld [vmem:[#allocation8 + $0x30] sm:$0xff]
    %v100 = vld [vmem:[#allocation8 + $0x38] sm:$0xff]
    %v101 = vld [vmem:[#allocation8 + $0x40] sm:$0xff]
    %v102 = vld [vmem:[#allocation8 + $0x48] sm:$0xff]
    %v103 = vld [vmem:[#allocation8 + $0x50] sm:$0xff]
    %v104 = vld [vmem:[#allocation8 + $0x58] sm:$0xff]
    %v105 = vld [vmem:[#allocation8 + $0x60] sm:$0xff]
    %v106 = vld [vmem:[#allocation8 + $0x68] sm:$0xff]
    %v107 = vld [vmem:[#allocation8 + $0x70] sm:$0xff]
    %v108 = vld [vmem:[#allocation8 + $0x78] sm:$0xff]
    %v109 = vld [vmem:[#allocation8 + $0x80] sm:$0xff]
    %v110 = vld [vmem:[#allocation8 + $0x88] sm:$0xff]
    %v111 = vld [vmem:[#allocation8 + $0x90] sm:$0xff]
    %v112 = vld [vmem:[#allocation8 + $0x98] sm:$0xff]
    %v113 = vld [vmem:[#allocation8 + $0xa0] sm:$0xff]
    %v114 = vld [vmem:[#allocation8 + $0xa8] sm:$0xff]
    %v115 = vld [vmem:[#allocation8 + $0xb0] sm:$0xff]
    %v116 = vld [vmem:[#allocation8 + $0xb8] sm:$0xff]
    %v117 = vld [vmem:[#allocation8 + $0xc0] sm:$0xff]
    %v118 = vld [vmem:[#allocation8 + $0xc8] sm:$0xff]
    %v119 = vld [vmem:[#allocation8 + $0xd0] sm:$0xff]
    %v120 = vld [vmem:[#allocation8 + $0xd8] sm:$0xff]
    %v121 = vld [vmem:[#allocation8 + $0xe0] sm:$0xff]
    %v122 = vld [vmem:[#allocation8 + $0xe8] sm:$0xff]
    %v123 = vld [vmem:[#allocation8 + $0xf0] sm:$0xff]
    %v124 = vld [vmem:[#allocation8 + $0xf8] sm:$0xff]
    %v125 = vld [vmem:[#allocation8 + $0x100] sm:$0xff]
    %v126 = vld [vmem:[#allocation8 + $0x108] sm:$0xff]
    %v127 = vld [vmem:[#allocation8 + $0x110] sm:$0xff]
    %v128 = vld [vmem:[#allocation8 + $0x118] sm:$0xff]
    %v129 = vld [vmem:[#allocation8 + $0x120] sm:$0xff]
    %v130 = vld [vmem:[#allocation8 + $0x128] sm:$0xff]
    %v131 = vld [vmem:[#allocation8 + $0x130] sm:$0xff]
    %v132 = vld [vmem:[#allocation8 + $0x138] sm:$0xff]
    %v133 = vld [vmem:[#allocation8 + $0x140] sm:$0xff]
    %v134 = vld [vmem:[#allocation8 + $0x148] sm:$0xff]
    %v135 = vld [vmem:[#allocation8 + $0x150] sm:$0xff]
    %v136 = vld [vmem:[#allocation8 + $0x158] sm:$0xff]
    %v137 = vld [vmem:[#allocation8 + $0x160] sm:$0xff]
    %v138 = vld [vmem:[#allocation8 + $0x168] sm:$0xff]
    %v139 = vld [vmem:[#allocation8 + $0x170] sm:$0xff]
    %v140 = vld [vmem:[#allocation8 + $0x178] sm:$0xff]
    %v141 = vld [vmem:[#allocation8 + $0x180] sm:$0xff]
    %v142 = vld [vmem:[#allocation8 + $0x188] sm:$0xff]
    %v143 = vld [vmem:[#allocation8 + $0x190] sm:$0xff]
    %v144 = vld [vmem:[#allocation8 + $0x198] sm:$0xff]
    %v145 = vld [vmem:[#allocation8 + $0x1a0] sm:$0xff]
    %v146 = vld [vmem:[#allocation8 + $0x1a8] sm:$0xff]
    %v147 = vld [vmem:[#allocation8 + $0x1b0] sm:$0xff]
    %v148 = vld [vmem:[#allocation8 + $0x1b8] sm:$0xff]
    %v149 = vld [vmem:[#allocation8 + $0x1c0] sm:$0xff]
    %v150 = vld [vmem:[#allocation8 + $0x1c8] sm:$0xff]
    %v151 = vld [vmem:[#allocation8 + $0x1d0] sm:$0xff]
    %v152 = vld [vmem:[#allocation8 + $0x1d8] sm:$0xff]
    %v153 = vld [vmem:[#allocation8 + $0x1e0] sm:$0xff]
    %v154 = vld [vmem:[#allocation8 + $0x1e8] sm:$0xff]
    %v155 = vld [vmem:[#allocation8 + $0x1f0] sm:$0xff]
    %v156 = vld [vmem:[#allocation8 + $0x1f8] sm:$0xff]
    %v157 = vld [vmem:[%s2] sm:$0xf]
    %v159 = vlaneseq
    %v160 = vshrl.u32 %v159, 7
    %v161 = vsub.s32 0, %v160
    %v162 = vrot.slane %v157, %v161
    %v163 = vlaneseq
    %v164 = vshrl.u32 %v163, 7
    %v165 = vsub.s32 1, %v164
    %v166 = vrot.slane %v157, %v165
    %v167 = vlaneseq
    %v168 = vshrl.u32 %v167, 7
    %v169 = vsub.s32 2, %v168
    %v170 = vrot.slane %v157, %v169
    %v171 = vlaneseq
    %v172 = vshrl.u32 %v171, 7
    %v173 = vsub.s32 3, %v172
    %v174 = vrot.slane %v157, %v173
    %179 = vmatprep.subr.mxu0 %v94
    %180 = vmatpush1.msra.mxu0 %v93
    %181 = vmatprep.subr.mxu0 %v98
    %182 = vmatpush1.msra.mxu0 %v97
    %183 = vmatprep.subr.mxu0 %v102
    %184 = vmatpush1.msra.mxu0 %v101
    %185 = vmatprep.subr.mxu0 %v106
    %186 = vmatpush1.msra.mxu0 %v105
    %187 = vmatprep.subr.mxu0 %v110
    %188 = vmatpush1.msra.mxu0 %v109
    %189 = vmatprep.subr.mxu0 %v114
    %190 = vmatpush1.msra.mxu0 %v113
    %191 = vmatprep.subr.mxu0 %v118
    %192 = vmatpush1.msra.mxu0 %v117
    %193 = vmatprep.subr.mxu0 %v122
    %194 = vmatpush1.msra.mxu0 %v121
    %195 = vmatprep.subr.mxu0 %v126
    %196 = vmatpush1.msra.mxu0 %v125
    %197 = vmatprep.subr.mxu0 %v130
    %198 = vmatpush1.msra.mxu0 %v129
    %199 = vmatprep.subr.mxu0 %v134
    %200 = vmatpush1.msra.mxu0 %v133
    %201 = vmatprep.subr.mxu0 %v138
    %202 = vmatpush1.msra.mxu0 %v137
    %203 = vmatprep.subr.mxu0 %v142
    %204 = vmatpush1.msra.mxu0 %v141
    %205 = vmatprep.subr.mxu0 %v146
    %206 = vmatpush1.msra.mxu0 %v145
    %207 = vmatprep.subr.mxu0 %v150
    %208 = vmatpush1.msra.mxu0 %v149
    %209 = vmatprep.subr.mxu0 %v154
    %210 = vmatpush1.msra.mxu0 %v153
    %211 = vmatprep.subr.mxu0 0.0
    %212 = vmatpush1.msra.mxu0 0.0
    %213 = vmatprep.subr.mxu0 0.0
    %214 = vmatpush1.msra.mxu0 0.0
    %215 = vmatprep.subr.mxu0 0.0
    %216 = vmatpush1.msra.mxu0 0.0
    %217 = vmatprep.subr.mxu0 0.0
    %218 = vmatpush1.msra.mxu0 0.0
    %219 = vmatprep.subr.mxu0 0.0
    %220 = vmatpush1.msra.mxu0 0.0
    %221 = vmatprep.subr.mxu0 0.0
    %222 = vmatpush1.msra.mxu0 0.0
    %223 = vmatprep.subr.mxu0 0.0
    %224 = vmatpush1.msra.mxu0 0.0
    %225 = vmatprep.subr.mxu0 0.0
    %226 = vmatpush1.msra.mxu0 0.0
    %227 = vmatprep.subr.mxu0 0.0
    %228 = vmatpush1.msra.mxu0 0.0
    %229 = vmatprep.subr.mxu0 0.0
    %230 = vmatpush1.msra.mxu0 0.0
    %231 = vmatprep.subr.mxu0 0.0
    %232 = vmatpush1.msra.mxu0 0.0
    %233 = vmatprep.subr.mxu0 0.0
    %234 = vmatpush1.msra.mxu0 0.0
    %235 = vmatprep.subr.mxu0 0.0
    %236 = vmatpush1.msra.mxu0 0.0
    %237 = vmatprep.subr.mxu0 0.0
    %238 = vmatpush1.msra.mxu0 0.0
    %239 = vmatprep.subr.mxu0 0.0
    %240 = vmatpush1.msra.mxu0 0.0
    %241 = vmatprep.subr.mxu0 0.0
    %242 = vmatpush1.msra.mxu0 0.0
    %243 = vmatprep.mubr.f32.mxu0 0.0
    %244 = vmatmul.mubr.f32.gmra.mrb[0].mxu0 %v85
    %v245 = vpop.f32.mrb[0].mxu0
    %v246 = vadd.f32 %v162, %v245
    %v247 = vpop.f32.mrb[0].mxu0
    %v248 = vadd.f32 %v166, %v247
    %249 = vmatprep.mubr.f32.mxu0 0.0
    %250 = vmatmul.mubr.f32.gmra.mrb[0].mxu0 %v86
    %v251 = vpop.f32.mrb[0].mxu0
    %v252 = vadd.f32 %v162, %v251
    %v253 = vpop.f32.mrb[0].mxu0
    %v254 = vadd.f32 %v166, %v253
    %255 = vmatprep.mubr.f32.mxu0 0.0
    %256 = vmatmul.mubr.f32.gmra.mrb[0].mxu0 %v87
    %v257 = vpop.f32.mrb[0].mxu0
    %v258 = vadd.f32 %v162, %v257
    %v259 = vpop.f32.mrb[0].mxu0
    %v260 = vadd.f32 %v166, %v259
    %261 = vmatprep.mubr.f32.mxu0 0.0
    %262 = vmatmul.mubr.f32.gmra.mrb[0].mxu0 %v88
    %v263 = vpop.f32.mrb[0].mxu0
    %v264 = vadd.f32 %v162, %v263
    %v265 = vpop.f32.mrb[0].mxu0
    %v266 = vadd.f32 %v166, %v265
    %267 = vmatprep.mubr.f32.mxu0 0.0
    %268 = vmatmul.mubr.f32.gmra.mrb[0].mxu0 %v89
    %v269 = vpop.f32.mrb[0].mxu0
    %v270 = vadd.f32 %v162, %v269
    %v271 = vpop.f32.mrb[0].mxu0
    %v272 = vadd.f32 %v166, %v271
    %273 = vmatprep.mubr.f32.mxu0 0.0
    %274 = vmatmul.mubr.f32.gmra.mrb[0].mxu0 %v90
    %v275 = vpop.f32.mrb[0].mxu0
    %v276 = vadd.f32 %v162, %v275
    %v277 = vpop.f32.mrb[0].mxu0
    %v278 = vadd.f32 %v166, %v277
    %279 = vmatprep.mubr.f32.mxu0 0.0
    %280 = vmatmul.mubr.f32.gmra.mrb[0].mxu0 %v91
    %v281 = vpop.f32.mrb[0].mxu0
    %v282 = vadd.f32 %v162, %v281
    %v283 = vpop.f32.mrb[0].mxu0
    %v284 = vadd.f32 %v166, %v283
    %285 = vmatprep.mubr.f32.mxu0 0.0
    %286 = vmatmul.mubr.f32.gmra.mrb[0].mxu0 %v92
    %v287 = vpop.f32.mrb[0].mxu0
    %v288 = vadd.f32 %v162, %v287
    %v289 = vpop.f32.mrb[0].mxu0
    %v290 = vadd.f32 %v166, %v289
    %291 = vdwg.mxu0
    %292 = vmatprep.subr.mxu0 %v96
    %293 = vmatpush1.msra.mxu0 %v95
    %294 = vmatprep.subr.mxu0 %v100
    %295 = vmatpush1.msra.mxu0 %v99
    %296 = vmatprep.subr.mxu0 %v104
    %297 = vmatpush1.msra.mxu0 %v103
    %298 = vmatprep.subr.mxu0 %v108
    %299 = vmatpush1.msra.mxu0 %v107
    %300 = vmatprep.subr.mxu0 %v112
    %301 = vmatpush1.msra.mxu0 %v111
    %302 = vmatprep.subr.mxu0 %v116
    %303 = vmatpush1.msra.mxu0 %v115
    %304 = vmatprep.subr.mxu0 %v120
    %305 = vmatpush1.msra.mxu0 %v119
    %306 = vmatprep.subr.mxu0 %v124
    %307 = vmatpush1.msra.mxu0 %v123
    %308 = vmatprep.subr.mxu0 %v128
    %309 = vmatpush1.msra.mxu0 %v127
    %310 = vmatprep.subr.mxu0 %v132
    %311 = vmatpush1.msra.mxu0 %v131
    %312 = vmatprep.subr.mxu0 %v136
    %313 = vmatpush1.msra.mxu0 %v135
    %314 = vmatprep.subr.mxu0 %v140
    %315 = vmatpush1.msra.mxu0 %v139
    %316 = vmatprep.subr.mxu0 %v144
    %317 = vmatpush1.msra.mxu0 %v143
    %318 = vmatprep.subr.mxu0 %v148
    %319 = vmatpush1.msra.mxu0 %v147
    %320 = vmatprep.subr.mxu0 %v152
    %321 = vmatpush1.msra.mxu0 %v151
    %322 = vmatprep.subr.mxu0 %v156
    %323 = vmatpush1.msra.mxu0 %v155
    %324 = vmatprep.subr.mxu0 0.0
    %325 = vmatpush1.msra.mxu0 0.0
    %326 = vmatprep.subr.mxu0 0.0
    %327 = vmatpush1.msra.mxu0 0.0
    %328 = vmatprep.subr.mxu0 0.0
    %329 = vmatpush1.msra.mxu0 0.0
    %330 = vmatprep.subr.mxu0 0.0
    %331 = vmatpush1.msra.mxu0 0.0
    %332 = vmatprep.subr.mxu0 0.0
    %333 = vmatpush1.msra.mxu0 0.0
    %334 = vmatprep.subr.mxu0 0.0
    %335 = vmatpush1.msra.mxu0 0.0
    %336 = vmatprep.subr.mxu0 0.0
    %337 = vmatpush1.msra.mxu0 0.0
    %338 = vmatprep.subr.mxu0 0.0
    %339 = vmatpush1.msra.mxu0 0.0
    %340 = vmatprep.subr.mxu0 0.0
    %341 = vmatpush1.msra.mxu0 0.0
    %342 = vmatprep.subr.mxu0 0.0
    %343 = vmatpush1.msra.mxu0 0.0
    %344 = vmatprep.subr.mxu0 0.0
    %345 = vmatpush1.msra.mxu0 0.0
    %346 = vmatprep.subr.mxu0 0.0
    %347 = vmatpush1.msra.mxu0 0.0
    %348 = vmatprep.subr.mxu0 0.0
    %349 = vmatpush1.msra.mxu0 0.0
    %350 = vmatprep.subr.mxu0 0.0
    %351 = vmatpush1.msra.mxu0 0.0
    %352 = vmatprep.subr.mxu0 0.0
    %353 = vmatpush1.msra.mxu0 0.0
    %354 = vmatprep.subr.mxu0 0.0
    %355 = vmatpush1.msra.mxu0 0.0
    %356 = vmatprep.mubr.f32.mxu0 0.0
    %357 = vmatmul.mubr.f32.gmra.mrb[0].mxu0 %v85
    %v358 = vpop.f32.mrb[0].mxu0
    %v359 = vadd.f32 %v170, %v358
    %v360 = vpop.f32.mrb[0].mxu0
    %v361 = vadd.f32 %v174, %v360
    %362 = vmatprep.mubr.f32.mxu0 0.0
    %363 = vmatmul.mubr.f32.gmra.mrb[0].mxu0 %v86
    %v364 = vpop.f32.mrb[0].mxu0
    %v365 = vadd.f32 %v170, %v364
    %v366 = vpop.f32.mrb[0].mxu0
    %v367 = vadd.f32 %v174, %v366
    %368 = vmatprep.mubr.f32.mxu0 0.0
    %369 = vmatmul.mubr.f32.gmra.mrb[0].mxu0 %v87
    %v370 = vpop.f32.mrb[0].mxu0
    %v371 = vadd.f32 %v170, %v370
    %v372 = vpop.f32.mrb[0].mxu0
    %v373 = vadd.f32 %v174, %v372
    %374 = vmatprep.mubr.f32.mxu0 0.0
    %375 = vmatmul.mubr.f32.gmra.mrb[0].mxu0 %v88
    %v376 = vpop.f32.mrb[0].mxu0
    %v377 = vadd.f32 %v170, %v376
    %v378 = vpop.f32.mrb[0].mxu0
    %v379 = vadd.f32 %v174, %v378
    %380 = vmatprep.mubr.f32.mxu0 0.0
    %381 = vmatmul.mubr.f32.gmra.mrb[0].mxu0 %v89
    %v382 = vpop.f32.mrb[0].mxu0
    %v383 = vadd.f32 %v170, %v382
    %v384 = vpop.f32.mrb[0].mxu0
    %v385 = vadd.f32 %v174, %v384
    %386 = vmatprep.mubr.f32.mxu0 0.0
    %387 = vmatmul.mubr.f32.gmra.mrb[0].mxu0 %v90
    %v388 = vpop.f32.mrb[0].mxu0
    %v389 = vadd.f32 %v170, %v388
    %v390 = vpop.f32.mrb[0].mxu0
    %v391 = vadd.f32 %v174, %v390
    %392 = vmatprep.mubr.f32.mxu0 0.0
    %393 = vmatmul.mubr.f32.gmra.mrb[0].mxu0 %v91
    %v394 = vpop.f32.mrb[0].mxu0
    %v395 = vadd.f32 %v170, %v394
    %v396 = vpop.f32.mrb[0].mxu0
    %v397 = vadd.f32 %v174, %v396
    %398 = vmatprep.mubr.f32.mxu0 0.0
    %399 = vmatmul.mubr.f32.gmra.mrb[0].mxu0 %v92
    %v400 = vpop.f32.mrb[0].mxu0
    %v401 = vadd.f32 %v170, %v400
    %v402 = vpop.f32.mrb[0].mxu0
    %v403 = vadd.f32 %v174, %v402
    %404 = vdwg.mxu0
    %405 = vst [vmem:[#allocation2] sm:$0xff] %v246
    %406 = vst [vmem:[#allocation2 + $0x8] sm:$0xff] %v248
    %407 = vst [vmem:[#allocation2 + $0x10] sm:$0xff] %v359
    %408 = vst [vmem:[#allocation2 + $0x18] sm:$0xff] %v361
    %409 = vst [vmem:[#allocation2 + $0x20] sm:$0xff] %v252
    %410 = vst [vmem:[#allocation2 + $0x28] sm:$0xff] %v254
    %411 = vst [vmem:[#allocation2 + $0x30] sm:$0xff] %v365
    %412 = vst [vmem:[#allocation2 + $0x38] sm:$0xff] %v367
    %413 = vst [vmem:[#allocation2 + $0x40] sm:$0xff] %v258
    %414 = vst [vmem:[#allocation2 + $0x48] sm:$0xff] %v260
    %415 = vst [vmem:[#allocation2 + $0x50] sm:$0xff] %v371
    %416 = vst [vmem:[#allocation2 + $0x58] sm:$0xff] %v373
    %417 = vst [vmem:[#allocation2 + $0x60] sm:$0xff] %v264
    %418 = vst [vmem:[#allocation2 + $0x68] sm:$0xff] %v266
    %419 = vst [vmem:[#allocation2 + $0x70] sm:$0xff] %v377
    %420 = vst [vmem:[#allocation2 + $0x78] sm:$0xff] %v379
    %421 = vst [vmem:[#allocation2 + $0x80] sm:$0xff] %v270
    %422 = vst [vmem:[#allocation2 + $0x88] sm:$0xff] %v272
    %423 = vst [vmem:[#allocation2 + $0x90] sm:$0xff] %v383
    %424 = vst [vmem:[#allocation2 + $0x98] sm:$0xff] %v385
    %425 = vst [vmem:[#allocation2 + $0xa0] sm:$0xff] %v276
    %426 = vst [vmem:[#allocation2 + $0xa8] sm:$0xff] %v278
    %427 = vst [vmem:[#allocation2 + $0xb0] sm:$0xff] %v389
    %428 = vst [vmem:[#allocation2 + $0xb8] sm:$0xff] %v391
    %429 = vst [vmem:[#allocation2 + $0xc0] sm:$0xff] %v282
    %430 = vst [vmem:[#allocation2 + $0xc8] sm:$0xff] %v284
    %431 = vst [vmem:[#allocation2 + $0xd0] sm:$0xff] %v395
    %432 = vst [vmem:[#allocation2 + $0xd8] sm:$0xff] %v397
    %433 = vst [vmem:[#allocation2 + $0xe0] sm:$0xff] %v288
    %434 = vst [vmem:[#allocation2 + $0xe8] sm:$0xff] %v290
    %435 = vst [vmem:[#allocation2 + $0xf0] sm:$0xff] %v401
    %436 = vst [vmem:[#allocation2 + $0xf8] sm:$0xff] %v403
    %v437 = vld [vmem:[#allocation10] sm:$0xff]
    %v438 = vld [vmem:[#allocation10 + $0x8] sm:$0xff]
    %v439 = vld [vmem:[#allocation10 + $0x10] sm:$0xff]
    %v440 = vld [vmem:[#allocation10 + $0x18] sm:$0xff]
    %v441 = vld [vmem:[#allocation10 + $0x20] sm:$0xff]
    %v442 = vld [vmem:[#allocation10 + $0x28] sm:$0xff]
    %v443 = vld [vmem:[#allocation10 + $0x30] sm:$0xff]
    %v444 = vld [vmem:[#allocation10 + $0x38] sm:$0xff]
    %v445 = vld [vmem:[#allocation10 + $0x40] sm:$0xff]
    %v446 = vld [vmem:[#allocation10 + $0x48] sm:$0xff]
    %v447 = vld [vmem:[#allocation10 + $0x50] sm:$0xff]
    %v448 = vld [vmem:[#allocation10 + $0x58] sm:$0xff]
    %v449 = vld [vmem:[#allocation10 + $0x60] sm:$0xff]
    %v450 = vld [vmem:[#allocation10 + $0x68] sm:$0xff]
    %v451 = vld [vmem:[#allocation10 + $0x70] sm:$0xff]
    %v452 = vld [vmem:[#allocation10 + $0x78] sm:$0xff]
    %v453 = vld [vmem:[#allocation10 + $0x80] sm:$0xff]
    %v454 = vld [vmem:[#allocation10 + $0x88] sm:$0xff]
    %v455 = vld [vmem:[#allocation10 + $0x90] sm:$0xff]
    %v456 = vld [vmem:[#allocation10 + $0x98] sm:$0xff]
    %v457 = vld [vmem:[#allocation10 + $0xa0] sm:$0xff]
    %v458 = vld [vmem:[#allocation10 + $0xa8] sm:$0xff]
    %v459 = vld [vmem:[#allocation10 + $0xb0] sm:$0xff]
    %v460 = vld [vmem:[#allocation10 + $0xb8] sm:$0xff]
    %v461 = vld [vmem:[#allocation10 + $0xc0] sm:$0xff]
    %v462 = vld [vmem:[#allocation10 + $0xc8] sm:$0xff]
    %v463 = vld [vmem:[#allocation10 + $0xd0] sm:$0xff]
    %v464 = vld [vmem:[#allocation10 + $0xd8] sm:$0xff]
    %v465 = vld [vmem:[#allocation10 + $0xe0] sm:$0xff]
    %v466 = vld [vmem:[#allocation10 + $0xe8] sm:$0xff]
    %v467 = vld [vmem:[#allocation10 + $0xf0] sm:$0xff]
    %v468 = vld [vmem:[#allocation10 + $0xf8] sm:$0xff]
    %v469 = vld [vmem:[#allocation10 + $0x100] sm:$0xff]
    %v470 = vld [vmem:[#allocation10 + $0x108] sm:$0xff]
    %v471 = vld [vmem:[#allocation10 + $0x110] sm:$0xff]
    %v472 = vld [vmem:[#allocation10 + $0x118] sm:$0xff]
    %v473 = vld [vmem:[#allocation10 + $0x120] sm:$0xff]
    %v474 = vld [vmem:[#allocation10 + $0x128] sm:$0xff]
    %v475 = vld [vmem:[#allocation10 + $0x130] sm:$0xff]
    %v476 = vld [vmem:[#allocation10 + $0x138] sm:$0xff]
    %v477 = vld [vmem:[#allocation10 + $0x140] sm:$0xff]
    %v478 = vld [vmem:[#allocation10 + $0x148] sm:$0xff]
    %v479 = vld [vmem:[#allocation10 + $0x150] sm:$0xff]
    %v480 = vld [vmem:[#allocation10 + $0x158] sm:$0xff]
    %v481 = vld [vmem:[#allocation10 + $0x160] sm:$0xff]
    %v482 = vld [vmem:[#allocation10 + $0x168] sm:$0xff]
    %v483 = vld [vmem:[#allocation10 + $0x170] sm:$0xff]
    %v484 = vld [vmem:[#allocation10 + $0x178] sm:$0xff]
    %v485 = vld [vmem:[#allocation10 + $0x180] sm:$0xff]
    %v486 = vld [vmem:[#allocation10 + $0x188] sm:$0xff]
    %v487 = vld [vmem:[#allocation10 + $0x190] sm:$0xff]
    %v488 = vld [vmem:[#allocation10 + $0x198] sm:$0xff]
    %v489 = vld [vmem:[#allocation10 + $0x1a0] sm:$0xff]
    %v490 = vld [vmem:[#allocation10 + $0x1a8] sm:$0xff]
    %v491 = vld [vmem:[#allocation10 + $0x1b0] sm:$0xff]
    %v492 = vld [vmem:[#allocation10 + $0x1b8] sm:$0xff]
    %v493 = vld [vmem:[#allocation10 + $0x1c0] sm:$0xff]
    %v494 = vld [vmem:[#allocation10 + $0x1c8] sm:$0xff]
    %v495 = vld [vmem:[#allocation10 + $0x1d0] sm:$0xff]
    %v496 = vld [vmem:[#allocation10 + $0x1d8] sm:$0xff]
    %v497 = vld [vmem:[#allocation10 + $0x1e0] sm:$0xff]
    %v498 = vld [vmem:[#allocation10 + $0x1e8] sm:$0xff]
    %v499 = vld [vmem:[#allocation10 + $0x1f0] sm:$0xff]
    %v500 = vld [vmem:[#allocation10 + $0x1f8] sm:$0xff]
    %v501 = vld [vmem:[#allocation3] sm:$0xff]
    %v502 = vld [vmem:[#allocation4] sm:$0xff]
    %v503 = vld [vmem:[#allocation2] sm:$0xff]
    %v504 = vld [vmem:[#allocation2 + $0x8] sm:$0xff]
    %v505 = vld [vmem:[#allocation2 + $0x10] sm:$0xff]
    %v506 = vld [vmem:[#allocation2 + $0x18] sm:$0xff]
    %507 = vmatprep.subr.mxu0 %v438
    %508 = vmatpush1.msra.mxu0 %v437
    %509 = vmatprep.subr.mxu0 %v442
    %510 = vmatpush1.msra.mxu0 %v441
    %511 = vmatprep.subr.mxu0 %v446
    %512 = vmatpush1.msra.mxu0 %v445
    %513 = vmatprep.subr.mxu0 %v450
    %514 = vmatpush1.msra.mxu0 %v449
    %515 = vmatprep.subr.mxu0 %v454
    %516 = vmatpush1.msra.mxu0 %v453
    %517 = vmatprep.subr.mxu0 %v458
    %518 = vmatpush1.msra.mxu0 %v457
    %519 = vmatprep.subr.mxu0 %v462
    %520 = vmatpush1.msra.mxu0 %v461
    %521 = vmatprep.subr.mxu0 %v466
    %522 = vmatpush1.msra.mxu0 %v465
    %523 = vmatprep.subr.mxu0 %v470
    %524 = vmatpush1.msra.mxu0 %v469
    %525 = vmatprep.subr.mxu0 %v474
    %526 = vmatpush1.msra.mxu0 %v473
    %527 = vmatprep.subr.mxu0 %v478
    %528 = vmatpush1.msra.mxu0 %v477
    %529 = vmatprep.subr.mxu0 %v482
    %530 = vmatpush1.msra.mxu0 %v481
    %531 = vmatprep.subr.mxu0 %v486
    %532 = vmatpush1.msra.mxu0 %v485
    %533 = vmatprep.subr.mxu0 %v490
    %534 = vmatpush1.msra.mxu0 %v489
    %535 = vmatprep.subr.mxu0 %v494
    %536 = vmatpush1.msra.mxu0 %v493
    %537 = vmatprep.subr.mxu0 %v498
    %538 = vmatpush1.msra.mxu0 %v497
    %539 = vmatprep.subr.mxu0 0.0
    %540 = vmatpush1.msra.mxu0 0.0
    %541 = vmatprep.subr.mxu0 0.0
    %542 = vmatpush1.msra.mxu0 0.0
    %543 = vmatprep.subr.mxu0 0.0
    %544 = vmatpush1.msra.mxu0 0.0
    %545 = vmatprep.subr.mxu0 0.0
    %546 = vmatpush1.msra.mxu0 0.0
    %547 = vmatprep.subr.mxu0 0.0
    %548 = vmatpush1.msra.mxu0 0.0
    %549 = vmatprep.subr.mxu0 0.0
    %550 = vmatpush1.msra.mxu0 0.0
    %551 = vmatprep.subr.mxu0 0.0
    %552 = vmatpush1.msra.mxu0 0.0
    %553 = vmatprep.subr.mxu0 0.0
    %554 = vmatpush1.msra.mxu0 0.0
    %555 = vmatprep.subr.mxu0 0.0
    %556 = vmatpush1.msra.mxu0 0.0
    %557 = vmatprep.subr.mxu0 0.0
    %558 = vmatpush1.msra.mxu0 0.0
    %559 = vmatprep.subr.mxu0 0.0
    %560 = vmatpush1.msra.mxu0 0.0
    %561 = vmatprep.subr.mxu0 0.0
    %562 = vmatpush1.msra.mxu0 0.0
    %563 = vmatprep.subr.mxu0 0.0
    %564 = vmatpush1.msra.mxu0 0.0
    %565 = vmatprep.subr.mxu0 0.0
    %566 = vmatpush1.msra.mxu0 0.0
    %567 = vmatprep.subr.mxu0 0.0
    %568 = vmatpush1.msra.mxu0 0.0
    %569 = vmatprep.subr.mxu0 0.0
    %570 = vmatpush1.msra.mxu0 0.0
    %571 = vmatprep.mubr.f32.mxu0 0.0
    %572 = vmatmul.mubr.f32.gmra.mrb[0].mxu0 %v501
    %v573 = vpop.f32.mrb[0].mxu0
    %v574 = vadd.f32 0.0, %v573
    %v575 = vpop.f32.mrb[0].mxu0
    %v576 = vadd.f32 0.0, %v575
    %577 = vdwg.mxu0
    %578 = vmatprep.subr.mxu0 %v440
    %579 = vmatpush1.msra.mxu0 %v439
    %580 = vmatprep.subr.mxu0 %v444
    %581 = vmatpush1.msra.mxu0 %v443
    %582 = vmatprep.subr.mxu0 %v448
    %583 = vmatpush1.msra.mxu0 %v447
    %584 = vmatprep.subr.mxu0 %v452
    %585 = vmatpush1.msra.mxu0 %v451
    %586 = vmatprep.subr.mxu0 %v456
    %587 = vmatpush1.msra.mxu0 %v455
    %588 = vmatprep.subr.mxu0 %v460
    %589 = vmatpush1.msra.mxu0 %v459
    %590 = vmatprep.subr.mxu0 %v464
    %591 = vmatpush1.msra.mxu0 %v463
    %592 = vmatprep.subr.mxu0 %v468
    %593 = vmatpush1.msra.mxu0 %v467
    %594 = vmatprep.subr.mxu0 %v472
    %595 = vmatpush1.msra.mxu0 %v471
    %596 = vmatprep.subr.mxu0 %v476
    %597 = vmatpush1.msra.mxu0 %v475
    %598 = vmatprep.subr.mxu0 %v480
    %599 = vmatpush1.msra.mxu0 %v479
    %600 = vmatprep.subr.mxu0 %v484
    %601 = vmatpush1.msra.mxu0 %v483
    %602 = vmatprep.subr.mxu0 %v488
    %603 = vmatpush1.msra.mxu0 %v487
    %604 = vmatprep.subr.mxu0 %v492
    %605 = vmatpush1.msra.mxu0 %v491
    %606 = vmatprep.subr.mxu0 %v496
    %607 = vmatpush1.msra.mxu0 %v495
    %608 = vmatprep.subr.mxu0 %v500
    %609 = vmatpush1.msra.mxu0 %v499
    %610 = vmatprep.subr.mxu0 0.0
    %611 = vmatpush1.msra.mxu0 0.0
    %612 = vmatprep.subr.mxu0 0.0
    %613 = vmatpush1.msra.mxu0 0.0
    %614 = vmatprep.subr.mxu0 0.0
    %615 = vmatpush1.msra.mxu0 0.0
    %616 = vmatprep.subr.mxu0 0.0
    %617 = vmatpush1.msra.mxu0 0.0
    %618 = vmatprep.subr.mxu0 0.0
    %619 = vmatpush1.msra.mxu0 0.0
    %620 = vmatprep.subr.mxu0 0.0
    %621 = vmatpush1.msra.mxu0 0.0
    %622 = vmatprep.subr.mxu0 0.0
    %623 = vmatpush1.msra.mxu0 0.0
    %624 = vmatprep.subr.mxu0 0.0
    %625 = vmatpush1.msra.mxu0 0.0
    %626 = vmatprep.subr.mxu0 0.0
    %627 = vmatpush1.msra.mxu0 0.0
    %628 = vmatprep.subr.mxu0 0.0
    %629 = vmatpush1.msra.mxu0 0.0
    %630 = vmatprep.subr.mxu0 0.0
    %631 = vmatpush1.msra.mxu0 0.0
    %632 = vmatprep.subr.mxu0 0.0
    %633 = vmatpush1.msra.mxu0 0.0
    %634 = vmatprep.subr.mxu0 0.0
    %635 = vmatpush1.msra.mxu0 0.0
    %636 = vmatprep.subr.mxu0 0.0
    %637 = vmatpush1.msra.mxu0 0.0
    %638 = vmatprep.subr.mxu0 0.0
    %639 = vmatpush1.msra.mxu0 0.0
    %640 = vmatprep.subr.mxu0 0.0
    %641 = vmatpush1.msra.mxu0 0.0
    %642 = vmatprep.mubr.f32.mxu0 0.0
    %643 = vmatmul.mubr.f32.gmra.mrb[0].mxu0 %v501
    %v644 = vpop.f32.mrb[0].mxu0
    %v645 = vadd.f32 0.0, %v644
    %v646 = vpop.f32.mrb[0].mxu0
    %v647 = vadd.f32 0.0, %v646
    %648 = vdwg.mxu0
    %v649 = vadd.f32 %v503, %v574
    %v650 = vadd.f32 %v504, %v576
    %v651 = vadd.f32 %v505, %v645
    %v652 = vadd.f32 %v506, %v647
    %v653 = vtanh.pop %v649
    %v654 = vxor.u32 %v650, 2147483648
    %v655 = vxor.u32 %v651, 2147483648
    %v656 = vxor.u32 %v652, 2147483648
    %v657 = vmul.f32 %v654, 1.442695
    %v658 = vpow.pop %v657
    %v659 = vmul.f32 %v655, 1.442695
    %v660 = vpow.pop %v659
    %v661 = vmul.f32 %v656, 1.442695
    %v662 = vpow.pop %v661
    %v663 = vadd.f32 %v658, 1.0
    %v664 = vadd.f32 %v660, 1.0
    %v665 = vadd.f32 %v662, 1.0
    %v666 = vrcp.pop %v663
    %v667 = vmul.f32 1.0, %v666
    %v668 = vrcp.pop %v664
    %v669 = vmul.f32 1.0, %v668
    %v670 = vrcp.pop %v665
    %v671 = vmul.f32 1.0, %v670
    %v672 = vmul.f32 %v653, %v667
    %v673 = vmul.f32 %v502, %v669
    %v674 = vadd.f32 %v672, %v673
    %v675 = vtanh.pop %v674
    %v676 = vmul.f32 %v675, %v671
    %s677 = scalar_lea.vmem [#allocation2], 32
    %v678 = vld [vmem:[%s677] sm:$0xff]
    %v679 = vld [vmem:[%s677 + $0x8] sm:$0xff]
    %v680 = vld [vmem:[%s677 + $0x10] sm:$0xff]
    %v681 = vld [vmem:[%s677 + $0x18] sm:$0xff]
    %682 = vmatprep.subr.mxu0 %v438
    %683 = vmatpush1.msra.mxu0 %v437
    %684 = vmatprep.subr.mxu0 %v442
    %685 = vmatpush1.msra.mxu0 %v441
    %686 = vmatprep.subr.mxu0 %v446
    %687 = vmatpush1.msra.mxu0 %v445
    %688 = vmatprep.subr.mxu0 %v450
    %689 = vmatpush1.msra.mxu0 %v449
    %690 = vmatprep.subr.mxu0 %v454
    %691 = vmatpush1.msra.mxu0 %v453
    %692 = vmatprep.subr.mxu0 %v458
    %693 = vmatpush1.msra.mxu0 %v457
    %694 = vmatprep.subr.mxu0 %v462
    %695 = vmatpush1.msra.mxu0 %v461
    %696 = vmatprep.subr.mxu0 %v466
    %697 = vmatpush1.msra.mxu0 %v465
    %698 = vmatprep.subr.mxu0 %v470
    %699 = vmatpush1.msra.mxu0 %v469
    %700 = vmatprep.subr.mxu0 %v474
    %701 = vmatpush1.msra.mxu0 %v473
    %702 = vmatprep.subr.mxu0 %v478
    %703 = vmatpush1.msra.mxu0 %v477
    %704 = vmatprep.subr.mxu0 %v482
    %705 = vmatpush1.msra.mxu0 %v481
    %706 = vmatprep.subr.mxu0 %v486
    %707 = vmatpush1.msra.mxu0 %v485
    %708 = vmatprep.subr.mxu0 %v490
    %709 = vmatpush1.msra.mxu0 %v489
    %710 = vmatprep.subr.mxu0 %v494
    %711 = vmatpush1.msra.mxu0 %v493
    %712 = vmatprep.subr.mxu0 %v498
    %713 = vmatpush1.msra.mxu0 %v497
    %714 = vmatprep.subr.mxu0 0.0
    %715 = vmatpush1.msra.mxu0 0.0
    %716 = vmatprep.subr.mxu0 0.0
    %717 = vmatpush1.msra.mxu0 0.0
    %718 = vmatprep.subr.mxu0 0.0
    %719 = vmatpush1.msra.mxu0 0.0
    %720 = vmatprep.subr.mxu0 0.0
    %721 = vmatpush1.msra.mxu0 0.0
    %722 = vmatprep.subr.mxu0 0.0
    %723 = vmatpush1.msra.mxu0 0.0
    %724 = vmatprep.subr.mxu0 0.0
    %725 = vmatpush1.msra.mxu0 0.0
    %726 = vmatprep.subr.mxu0 0.0
    %727 = vmatpush1.msra.mxu0 0.0
    %728 = vmatprep.subr.mxu0 0.0
    %729 = vmatpush1.msra.mxu0 0.0
    %730 = vmatprep.subr.mxu0 0.0
    %731 = vmatpush1.msra.mxu0 0.0
    %732 = vmatprep.subr.mxu0 0.0
    %733 = vmatpush1.msra.mxu0 0.0
    %734 = vmatprep.subr.mxu0 0.0
    %735 = vmatpush1.msra.mxu0 0.0
    %736 = vmatprep.subr.mxu0 0.0
    %737 = vmatpush1.msra.mxu0 0.0
    %738 = vmatprep.subr.mxu0 0.0
    %739 = vmatpush1.msra.mxu0 0.0
    %740 = vmatprep.subr.mxu0 0.0
    %741 = vmatpush1.msra.mxu0 0.0
    %742 = vmatprep.subr.mxu0 0.0
    %743 = vmatpush1.msra.mxu0 0.0
    %744 = vmatprep.subr.mxu0 0.0
    %745 = vmatpush1.msra.mxu0 0.0
    %746 = vmatprep.mubr.f32.mxu0 0.0
    %747 = vmatmul.mubr.f32.gmra.mrb[0].mxu0 %v676
    %v748 = vpop.f32.mrb[0].mxu0
    %v749 = vadd.f32 0.0, %v748
    %v750 = vpop.f32.mrb[0].mxu0
    %v751 = vadd.f32 0.0, %v750
    %752 = vdwg.mxu0
    %753 = vmatprep.subr.mxu0 %v440
    %754 = vmatpush1.msra.mxu0 %v439
    %755 = vmatprep.subr.mxu0 %v444
    %756 = vmatpush1.msra.mxu0 %v443
    %757 = vmatprep.subr.mxu0 %v448
    %758 = vmatpush1.msra.mxu0 %v447
    %759 = vmatprep.subr.mxu0 %v452
    %760 = vmatpush1.msra.mxu0 %v451
    %761 = vmatprep.subr.mxu0 %v456
    %762 = vmatpush1.msra.mxu0 %v455
    %763 = vmatprep.subr.mxu0 %v460
    %764 = vmatpush1.msra.mxu0 %v459
    %765 = vmatprep.subr.mxu0 %v464
    %766 = vmatpush1.msra.mxu0 %v463
    %767 = vmatprep.subr.mxu0 %v468
    %768 = vmatpush1.msra.mxu0 %v467
    %769 = vmatprep.subr.mxu0 %v472
    %770 = vmatpush1.msra.mxu0 %v471
    %771 = vmatprep.subr.mxu0 %v476
    %772 = vmatpush1.msra.mxu0 %v475
    %773 = vmatprep.subr.mxu0 %v480
    %774 = vmatpush1.msra.mxu0 %v479
    %775 = vmatprep.subr.mxu0 %v484
    %776 = vmatpush1.msra.mxu0 %v483
    %777 = vmatprep.subr.mxu0 %v488
    %778 = vmatpush1.msra.mxu0 %v487
    %779 = vmatprep.subr.mxu0 %v492
    %780 = vmatpush1.msra.mxu0 %v491
    %781 = vmatprep.subr.mxu0 %v496
    %782 = vmatpush1.msra.mxu0 %v495
    %783 = vmatprep.subr.mxu0 %v500
    %784 = vmatpush1.msra.mxu0 %v499
    %785 = vmatprep.subr.mxu0 0.0
    %786 = vmatpush1.msra.mxu0 0.0
    %787 = vmatprep.subr.mxu0 0.0
    %788 = vmatpush1.msra.mxu0 0.0
    %789 = vmatprep.subr.mxu0 0.0
    %790 = vmatpush1.msra.mxu0 0.0
    %791 = vmatprep.subr.mxu0 0.0
    %792 = vmatpush1.msra.mxu0 0.0
    %793 = vmatprep.subr.mxu0 0.0
    %794 = vmatpush1.msra.mxu0 0.0
    %795 = vmatprep.subr.mxu0 0.0
    %796 = vmatpush1.msra.mxu0 0.0
    %797 = vmatprep.subr.mxu0 0.0
    %798 = vmatpush1.msra.mxu0 0.0
    %799 = vmatprep.subr.mxu0 0.0
    %800 = vmatpush1.msra.mxu0 0.0
    %801 = vmatprep.subr.mxu0 0.0
    %802 = vmatpush1.msra.mxu0 0.0
    %803 = vmatprep.subr.mxu0 0.0
    %804 = vmatpush1.msra.mxu0 0.0
    %805 = vmatprep.subr.mxu0 0.0
    %806 = vmatpush1.msra.mxu0 0.0
    %807 = vmatprep.subr.mxu0 0.0
    %808 = vmatpush1.msra.mxu0 0.0
    %809 = vmatprep.subr.mxu0 0.0
    %810 = vmatpush1.msra.mxu0 0.0
    %811 = vmatprep.subr.mxu0 0.0
    %812 = vmatpush1.msra.mxu0 0.0
    %813 = vmatprep.subr.mxu0 0.0
    %814 = vmatpush1.msra.mxu0 0.0
    %815 = vmatprep.subr.mxu0 0.0
    %816 = vmatpush1.msra.mxu0 0.0
    %817 = vmatprep.mubr.f32.mxu0 0.0
    %818 = vmatmul.mubr.f32.gmra.mrb[0].mxu0 %v676
    %v819 = vpop.f32.mrb[0].mxu0
    %v820 = vadd.f32 0.0, %v819
    %v821 = vpop.f32.mrb[0].mxu0
    %v822 = vadd.f32 0.0, %v821
    %823 = vdwg.mxu0
    %v824 = vadd.f32 %v678, %v749
    %v825 = vadd.f32 %v679, %v751
    %v826 = vadd.f32 %v680, %v820
    %v827 = vadd.f32 %v681, %v822
    %v828 = vtanh.pop %v824
    %v829 = vxor.u32 %v825, 2147483648
    %v830 = vxor.u32 %v826, 2147483648
    %v831 = vxor.u32 %v827, 2147483648
    %v832 = vmul.f32 %v829, 1.442695
    %v833 = vpow.pop %v832
    %v834 = vmul.f32 %v830, 1.442695
    %v835 = vpow.pop %v834
    %v836 = vmul.f32 %v831, 1.442695
    %v837 = vpow.pop %v836
    %v838 = vadd.f32 %v833, 1.0
    %v839 = vadd.f32 %v835, 1.0
    %v840 = vadd.f32 %v837, 1.0
    %v841 = vrcp.pop %v838
    %v842 = vmul.f32 1.0, %v841
    %v843 = vrcp.pop %v839
    %v844 = vmul.f32 1.0, %v843
    %v845 = vrcp.pop %v840
    %v846 = vmul.f32 1.0, %v845
    %v847 = vmul.f32 %v828, %v842
    %v848 = vmul.f32 %v674, %v844
    %v849 = vadd.f32 %v847, %v848
    %v850 = vtanh.pop %v849
    %v851 = vmul.f32 %v850, %v846
    %s852 = scalar_lea.vmem [#allocation2], 64
    %v853 = vld [vmem:[%s852] sm:$0xff]
    %v854 = vld [vmem:[%s852 + $0x8] sm:$0xff]
    %v855 = vld [vmem:[%s852 + $0x10] sm:$0xff]
    %v856 = vld [vmem:[%s852 + $0x18] sm:$0xff]
    %857 = vmatprep.subr.mxu0 %v438
    %858 = vmatpush1.msra.mxu0 %v437
    %859 = vmatprep.subr.mxu0 %v442
    %860 = vmatpush1.msra.mxu0 %v441
    %861 = vmatprep.subr.mxu0 %v446
    %862 = vmatpush1.msra.mxu0 %v445
    %863 = vmatprep.subr.mxu0 %v450
    %864 = vmatpush1.msra.mxu0 %v449
    %865 = vmatprep.subr.mxu0 %v454
    %866 = vmatpush1.msra.mxu0 %v453
    %867 = vmatprep.subr.mxu0 %v458
    %868 = vmatpush1.msra.mxu0 %v457
    %869 = vmatprep.subr.mxu0 %v462
    %870 = vmatpush1.msra.mxu0 %v461
    %871 = vmatprep.subr.mxu0 %v466
    %872 = vmatpush1.msra.mxu0 %v465
    %873 = vmatprep.subr.mxu0 %v470
    %874 = vmatpush1.msra.mxu0 %v469
    %875 = vmatprep.subr.mxu0 %v474
    %876 = vmatpush1.msra.mxu0 %v473
    %877 = vmatprep.subr.mxu0 %v478
    %878 = vmatpush1.msra.mxu0 %v477
    %879 = vmatprep.subr.mxu0 %v482
    %880 = vmatpush1.msra.mxu0 %v481
    %881 = vmatprep.subr.mxu0 %v486
    %882 = vmatpush1.msra.mxu0 %v485
    %883 = vmatprep.subr.mxu0 %v490
    %884 = vmatpush1.msra.mxu0 %v489
    %885 = vmatprep.subr.mxu0 %v494
    %886 = vmatpush1.msra.mxu0 %v493
    %887 = vmatprep.subr.mxu0 %v498
    %888 = vmatpush1.msra.mxu0 %v497
    %889 = vmatprep.subr.mxu0 0.0
    %890 = vmatpush1.msra.mxu0 0.0
    %891 = vmatprep.subr.mxu0 0.0
    %892 = vmatpush1.msra.mxu0 0.0
    %893 = vmatprep.subr.mxu0 0.0
    %894 = vmatpush1.msra.mxu0 0.0
    %895 = vmatprep.subr.mxu0 0.0
    %896 = vmatpush1.msra.mxu0 0.0
    %897 = vmatprep.subr.mxu0 0.0
    %898 = vmatpush1.msra.mxu0 0.0
    %899 = vmatprep.subr.mxu0 0.0
    %900 = vmatpush1.msra.mxu0 0.0
    %901 = vmatprep.subr.mxu0 0.0
    %902 = vmatpush1.msra.mxu0 0.0
    %903 = vmatprep.subr.mxu0 0.0
    %904 = vmatpush1.msra.mxu0 0.0
    %905 = vmatprep.subr.mxu0 0.0
    %906 = vmatpush1.msra.mxu0 0.0
    %907 = vmatprep.subr.mxu0 0.0
    %908 = vmatpush1.msra.mxu0 0.0
    %909 = vmatprep.subr.mxu0 0.0
    %910 = vmatpush1.msra.mxu0 0.0
    %911 = vmatprep.subr.mxu0 0.0
    %912 = vmatpush1.msra.mxu0 0.0
    %913 = vmatprep.subr.mxu0 0.0
    %914 = vmatpush1.msra.mxu0 0.0
    %915 = vmatprep.subr.mxu0 0.0
    %916 = vmatpush1.msra.mxu0 0.0
    %917 = vmatprep.subr.mxu0 0.0
    %918 = vmatpush1.msra.mxu0 0.0
    %919 = vmatprep.subr.mxu0 0.0
    %920 = vmatpush1.msra.mxu0 0.0
    %921 = vmatprep.mubr.f32.mxu0 0.0
    %922 = vmatmul.mubr.f32.gmra.mrb[0].mxu0 %v851
    %v923 = vpop.f32.mrb[0].mxu0
    %v924 = vadd.f32 0.0, %v923
    %v925 = vpop.f32.mrb[0].mxu0
    %v926 = vadd.f32 0.0, %v925
    %927 = vdwg.mxu0
    %928 = vmatprep.subr.mxu0 %v440
    %929 = vmatpush1.msra.mxu0 %v439
    %930 = vmatprep.subr.mxu0 %v444
    %931 = vmatpush1.msra.mxu0 %v443
    %932 = vmatprep.subr.mxu0 %v448
    %933 = vmatpush1.msra.mxu0 %v447
    %934 = vmatprep.subr.mxu0 %v452
    %935 = vmatpush1.msra.mxu0 %v451
    %936 = vmatprep.subr.mxu0 %v456
    %937 = vmatpush1.msra.mxu0 %v455
    %938 = vmatprep.subr.mxu0 %v460
    %939 = vmatpush1.msra.mxu0 %v459
    %940 = vmatprep.subr.mxu0 %v464
    %941 = vmatpush1.msra.mxu0 %v463
    %942 = vmatprep.subr.mxu0 %v468
    %943 = vmatpush1.msra.mxu0 %v467
    %944 = vmatprep.subr.mxu0 %v472
    %945 = vmatpush1.msra.mxu0 %v471
    %946 = vmatprep.subr.mxu0 %v476
    %947 = vmatpush1.msra.mxu0 %v475
    %948 = vmatprep.subr.mxu0 %v480
    %949 = vmatpush1.msra.mxu0 %v479
    %950 = vmatprep.subr.mxu0 %v484
    %951 = vmatpush1.msra.mxu0 %v483
    %952 = vmatprep.subr.mxu0 %v488
    %953 = vmatpush1.msra.mxu0 %v487
    %954 = vmatprep.subr.mxu0 %v492
    %955 = vmatpush1.msra.mxu0 %v491
    %956 = vmatprep.subr.mxu0 %v496
    %957 = vmatpush1.msra.mxu0 %v495
    %958 = vmatprep.subr.mxu0 %v500
    %959 = vmatpush1.msra.mxu0 %v499
    %960 = vmatprep.subr.mxu0 0.0
    %961 = vmatpush1.msra.mxu0 0.0
    %962 = vmatprep.subr.mxu0 0.0
    %963 = vmatpush1.msra.mxu0 0.0
    %964 = vmatprep.subr.mxu0 0.0
    %965 = vmatpush1.msra.mxu0 0.0
    %966 = vmatprep.subr.mxu0 0.0
    %967 = vmatpush1.msra.mxu0 0.0
    %968 = vmatprep.subr.mxu0 0.0
    %969 = vmatpush1.msra.mxu0 0.0
    %970 = vmatprep.subr.mxu0 0.0
    %971 = vmatpush1.msra.mxu0 0.0
    %972 = vmatprep.subr.mxu0 0.0
    %973 = vmatpush1.msra.mxu0 0.0
    %974 = vmatprep.subr.mxu0 0.0
    %975 = vmatpush1.msra.mxu0 0.0
    %976 = vmatprep.subr.mxu0 0.0
    %977 = vmatpush1.msra.mxu0 0.0
    %978 = vmatprep.subr.mxu0 0.0
    %979 = vmatpush1.msra.mxu0 0.0
    %980 = vmatprep.subr.mxu0 0.0
    %981 = vmatpush1.msra.mxu0 0.0
    %982 = vmatprep.subr.mxu0 0.0
    %983 = vmatpush1.msra.mxu0 0.0
    %984 = vmatprep.subr.mxu0 0.0
    %985 = vmatpush1.msra.mxu0 0.0
    %986 = vmatprep.subr.mxu0 0.0
    %987 = vmatpush1.msra.mxu0 0.0
    %988 = vmatprep.subr.mxu0 0.0
    %989 = vmatpush1.msra.mxu0 0.0
    %990 = vmatprep.subr.mxu0 0.0
    %991 = vmatpush1.msra.mxu0 0.0
    %992 = vmatprep.mubr.f32.mxu0 0.0
    %993 = vmatmul.mubr.f32.gmra.mrb[0].mxu0 %v851
    %v994 = vpop.f32.mrb[0].mxu0
    %v995 = vadd.f32 0.0, %v994
    %v996 = vpop.f32.mrb[0].mxu0
    %v997 = vadd.f32 0.0, %v996
    %998 = vdwg.mxu0
    %v999 = vadd.f32 %v853, %v924
    %v1000 = vadd.f32 %v854, %v926
    %v1001 = vadd.f32 %v855, %v995
    %v1002 = vadd.f32 %v856, %v997
    %v1003 = vtanh.pop %v999
    %v1004 = vxor.u32 %v1000, 2147483648
    %v1005 = vxor.u32 %v1001, 2147483648
    %v1006 = vxor.u32 %v1002, 2147483648
    %v1007 = vmul.f32 %v1004, 1.442695
    %v1008 = vpow.pop %v1007
    %v1009 = vmul.f32 %v1005, 1.442695
    %v1010 = vpow.pop %v1009
    %v1011 = vmul.f32 %v1006, 1.442695
    %v1012 = vpow.pop %v1011
    %v1013 = vadd.f32 %v1008, 1.0
    %v1014 = vadd.f32 %v1010, 1.0
    %v1015 = vadd.f32 %v1012, 1.0
    %v1016 = vrcp.pop %v1013
    %v1017 = vmul.f32 1.0, %v1016
    %v1018 = vrcp.pop %v1014
    %v1019 = vmul.f32 1.0, %v1018
    %v1020 = vrcp.pop %v1015
    %v1021 = vmul.f32 1.0, %v1020
    %v1022 = vmul.f32 %v1003, %v1017
    %v1023 = vmul.f32 %v849, %v1019
    %v1024 = vadd.f32 %v1022, %v1023
    %v1025 = vtanh.pop %v1024
    %v1026 = vmul.f32 %v1025, %v1021
    %s1027 = scalar_lea.vmem [#allocation2], 96
    %v1028 = vld [vmem:[%s1027] sm:$0xff]
    %v1029 = vld [vmem:[%s1027 + $0x8] sm:$0xff]
    %v1030 = vld [vmem:[%s1027 + $0x10] sm:$0xff]
    %v1031 = vld [vmem:[%s1027 + $0x18] sm:$0xff]
    %1032 = vmatprep.subr.mxu0 %v438
    %1033 = vmatpush1.msra.mxu0 %v437
    %1034 = vmatprep.subr.mxu0 %v442
    %1035 = vmatpush1.msra.mxu0 %v441
    %1036 = vmatprep.subr.mxu0 %v446
    %1037 = vmatpush1.msra.mxu0 %v445
    %1038 = vmatprep.subr.mxu0 %v450
    %1039 = vmatpush1.msra.mxu0 %v449
    %1040 = vmatprep.subr.mxu0 %v454
    %1041 = vmatpush1.msra.mxu0 %v453
    %1042 = vmatprep.subr.mxu0 %v458
    %1043 = vmatpush1.msra.mxu0 %v457
    %1044 = vmatprep.subr.mxu0 %v462
    %1045 = vmatpush1.msra.mxu0 %v461
    %1046 = vmatprep.subr.mxu0 %v466
    %1047 = vmatpush1.msra.mxu0 %v465
    %1048 = vmatprep.subr.mxu0 %v470
    %1049 = vmatpush1.msra.mxu0 %v469
    %1050 = vmatprep.subr.mxu0 %v474
    %1051 = vmatpush1.msra.mxu0 %v473
    %1052 = vmatprep.subr.mxu0 %v478
    %1053 = vmatpush1.msra.mxu0 %v477
    %1054 = vmatprep.subr.mxu0 %v482
    %1055 = vmatpush1.msra.mxu0 %v481
    %1056 = vmatprep.subr.mxu0 %v486
    %1057 = vmatpush1.msra.mxu0 %v485
    %1058 = vmatprep.subr.mxu0 %v490
    %1059 = vmatpush1.msra.mxu0 %v489
    %1060 = vmatprep.subr.mxu0 %v494
    %1061 = vmatpush1.msra.mxu0 %v493
    %1062 = vmatprep.subr.mxu0 %v498
    %1063 = vmatpush1.msra.mxu0 %v497
    %1064 = vmatprep.subr.mxu0 0.0
    %1065 = vmatpush1.msra.mxu0 0.0
    %1066 = vmatprep.subr.mxu0 0.0
    %1067 = vmatpush1.msra.mxu0 0.0
    %1068 = vmatprep.subr.mxu0 0.0
    %1069 = vmatpush1.msra.mxu0 0.0
    %1070 = vmatprep.subr.mxu0 0.0
    %1071 = vmatpush1.msra.mxu0 0.0
    %1072 = vmatprep.subr.mxu0 0.0
    %1073 = vmatpush1.msra.mxu0 0.0
    %1074 = vmatprep.subr.mxu0 0.0
    %1075 = vmatpush1.msra.mxu0 0.0
    %1076 = vmatprep.subr.mxu0 0.0
    %1077 = vmatpush1.msra.mxu0 0.0
    %1078 = vmatprep.subr.mxu0 0.0
    %1079 = vmatpush1.msra.mxu0 0.0
    %1080 = vmatprep.subr.mxu0 0.0
    %1081 = vmatpush1.msra.mxu0 0.0
    %1082 = vmatprep.subr.mxu0 0.0
    %1083 = vmatpush1.msra.mxu0 0.0
    %1084 = vmatprep.subr.mxu0 0.0
    %1085 = vmatpush1.msra.mxu0 0.0
    %1086 = vmatprep.subr.mxu0 0.0
    %1087 = vmatpush1.msra.mxu0 0.0
    %1088 = vmatprep.subr.mxu0 0.0
    %1089 = vmatpush1.msra.mxu0 0.0
    %1090 = vmatprep.subr.mxu0 0.0
    %1091 = vmatpush1.msra.mxu0 0.0
    %1092 = vmatprep.subr.mxu0 0.0
    %1093 = vmatpush1.msra.mxu0 0.0
    %1094 = vmatprep.subr.mxu0 0.0
    %1095 = vmatpush1.msra.mxu0 0.0
    %1096 = vmatprep.mubr.f32.mxu0 0.0
    %1097 = vmatmul.mubr.f32.gmra.mrb[0].mxu0 %v1026
    %v1098 = vpop.f32.mrb[0].mxu0
    %v1099 = vadd.f32 0.0, %v1098
    %v1100 = vpop.f32.mrb[0].mxu0
    %v1101 = vadd.f32 0.0, %v1100
    %1102 = vdwg.mxu0
    %1103 = vmatprep.subr.mxu0 %v440
    %1104 = vmatpush1.msra.mxu0 %v439
    %1105 = vmatprep.subr.mxu0 %v444
    %1106 = vmatpush1.msra.mxu0 %v443
    %1107 = vmatprep.subr.mxu0 %v448
    %1108 = vmatpush1.msra.mxu0 %v447
    %1109 = vmatprep.subr.mxu0 %v452
    %1110 = vmatpush1.msra.mxu0 %v451
    %1111 = vmatprep.subr.mxu0 %v456
    %1112 = vmatpush1.msra.mxu0 %v455
    %1113 = vmatprep.subr.mxu0 %v460
    %1114 = vmatpush1.msra.mxu0 %v459
    %1115 = vmatprep.subr.mxu0 %v464
    %1116 = vmatpush1.msra.mxu0 %v463
    %1117 = vmatprep.subr.mxu0 %v468
    %1118 = vmatpush1.msra.mxu0 %v467
    %1119 = vmatprep.subr.mxu0 %v472
    %1120 = vmatpush1.msra.mxu0 %v471
    %1121 = vmatprep.subr.mxu0 %v476
    %1122 = vmatpush1.msra.mxu0 %v475
    %1123 = vmatprep.subr.mxu0 %v480
    %1124 = vmatpush1.msra.mxu0 %v479
    %1125 = vmatprep.subr.mxu0 %v484
    %1126 = vmatpush1.msra.mxu0 %v483
    %1127 = vmatprep.subr.mxu0 %v488
    %1128 = vmatpush1.msra.mxu0 %v487
    %1129 = vmatprep.subr.mxu0 %v492
    %1130 = vmatpush1.msra.mxu0 %v491
    %1131 = vmatprep.subr.mxu0 %v496
    %1132 = vmatpush1.msra.mxu0 %v495
    %1133 = vmatprep.subr.mxu0 %v500
    %1134 = vmatpush1.msra.mxu0 %v499
    %1135 = vmatprep.subr.mxu0 0.0
    %1136 = vmatpush1.msra.mxu0 0.0
    %1137 = vmatprep.subr.mxu0 0.0
    %1138 = vmatpush1.msra.mxu0 0.0
    %1139 = vmatprep.subr.mxu0 0.0
    %1140 = vmatpush1.msra.mxu0 0.0
    %1141 = vmatprep.subr.mxu0 0.0
    %1142 = vmatpush1.msra.mxu0 0.0
    %1143 = vmatprep.subr.mxu0 0.0
    %1144 = vmatpush1.msra.mxu0 0.0
    %1145 = vmatprep.subr.mxu0 0.0
    %1146 = vmatpush1.msra.mxu0 0.0
    %1147 = vmatprep.subr.mxu0 0.0
    %1148 = vmatpush1.msra.mxu0 0.0
    %1149 = vmatprep.subr.mxu0 0.0
    %1150 = vmatpush1.msra.mxu0 0.0
    %1151 = vmatprep.subr.mxu0 0.0
    %1152 = vmatpush1.msra.mxu0 0.0
    %1153 = vmatprep.subr.mxu0 0.0
    %1154 = vmatpush1.msra.mxu0 0.0
    %1155 = vmatprep.subr.mxu0 0.0
    %1156 = vmatpush1.msra.mxu0 0.0
    %1157 = vmatprep.subr.mxu0 0.0
    %1158 = vmatpush1.msra.mxu0 0.0
    %1159 = vmatprep.subr.mxu0 0.0
    %1160 = vmatpush1.msra.mxu0 0.0
    %1161 = vmatprep.subr.mxu0 0.0
    %1162 = vmatpush1.msra.mxu0 0.0
    %1163 = vmatprep.subr.mxu0 0.0
    %1164 = vmatpush1.msra.mxu0 0.0
    %1165 = vmatprep.subr.mxu0 0.0
    %1166 = vmatpush1.msra.mxu0 0.0
    %1167 = vmatprep.mubr.f32.mxu0 0.0
    %1168 = vmatmul.mubr.f32.gmra.mrb[0].mxu0 %v1026
    %v1169 = vpop.f32.mrb[0].mxu0
    %v1170 = vadd.f32 0.0, %v1169
    %v1171 = vpop.f32.mrb[0].mxu0
    %v1172 = vadd.f32 0.0, %v1171
    %1173 = vdwg.mxu0
    %v1174 = vadd.f32 %v1028, %v1099
    %v1175 = vadd.f32 %v1029, %v1101
    %v1176 = vadd.f32 %v1030, %v1170
    %v1177 = vadd.f32 %v1031, %v1172
    %v1178 = vtanh.pop %v1174
    %v1179 = vxor.u32 %v1175, 2147483648
    %v1180 = vxor.u32 %v1176, 2147483648
    %v1181 = vxor.u32 %v1177, 2147483648
    %v1182 = vmul.f32 %v1179, 1.442695
    %v1183 = vpow.pop %v1182
    %v1184 = vmul.f32 %v1180, 1.442695
    %v1185 = vpow.pop %v1184
    %v1186 = vmul.f32 %v1181, 1.442695
    %v1187 = vpow.pop %v1186
    %v1188 = vadd.f32 %v1183, 1.0
    %v1189 = vadd.f32 %v1185, 1.0
    %v1190 = vadd.f32 %v1187, 1.0
    %v1191 = vrcp.pop %v1188
    %v1192 = vmul.f32 1.0, %v1191
    %v1193 = vrcp.pop %v1189
    %v1194 = vmul.f32 1.0, %v1193
    %v1195 = vrcp.pop %v1190
    %v1196 = vmul.f32 1.0, %v1195
    %v1197 = vmul.f32 %v1178, %v1192
    %v1198 = vmul.f32 %v1024, %v1194
    %v1199 = vadd.f32 %v1197, %v1198
    %v1200 = vtanh.pop %v1199
    %v1201 = vmul.f32 %v1200, %v1196
    %s1202 = scalar_lea.vmem [#allocation2], 128
    %v1203 = vld [vmem:[%s1202] sm:$0xff]
    %v1204 = vld [vmem:[%s1202 + $0x8] sm:$0xff]
    %v1205 = vld [vmem:[%s1202 + $0x10] sm:$0xff]
    %v1206 = vld [vmem:[%s1202 + $0x18] sm:$0xff]
    %1207 = vmatprep.subr.mxu0 %v438
    %1208 = vmatpush1.msra.mxu0 %v437
    %1209 = vmatprep.subr.mxu0 %v442
    %1210 = vmatpush1.msra.mxu0 %v441
    %1211 = vmatprep.subr.mxu0 %v446
    %1212 = vmatpush1.msra.mxu0 %v445
    %1213 = vmatprep.subr.mxu0 %v450
    %1214 = vmatpush1.msra.mxu0 %v449
    %1215 = vmatprep.subr.mxu0 %v454
    %1216 = vmatpush1.msra.mxu0 %v453
    %1217 = vmatprep.subr.mxu0 %v458
    %1218 = vmatpush1.msra.mxu0 %v457
    %1219 = vmatprep.subr.mxu0 %v462
    %1220 = vmatpush1.msra.mxu0 %v461
    %1221 = vmatprep.subr.mxu0 %v466
    %1222 = vmatpush1.msra.mxu0 %v465
    %1223 = vmatprep.subr.mxu0 %v470
    %1224 = vmatpush1.msra.mxu0 %v469
    %1225 = vmatprep.subr.mxu0 %v474
    %1226 = vmatpush1.msra.mxu0 %v473
    %1227 = vmatprep.subr.mxu0 %v478
    %1228 = vmatpush1.msra.mxu0 %v477
    %1229 = vmatprep.subr.mxu0 %v482
    %1230 = vmatpush1.msra.mxu0 %v481
    %1231 = vmatprep.subr.mxu0 %v486
    %1232 = vmatpush1.msra.mxu0 %v485
    %1233 = vmatprep.subr.mxu0 %v490
    %1234 = vmatpush1.msra.mxu0 %v489
    %1235 = vmatprep.subr.mxu0 %v494
    %1236 = vmatpush1.msra.mxu0 %v493
    %1237 = vmatprep.subr.mxu0 %v498
    %1238 = vmatpush1.msra.mxu0 %v497
    %1239 = vmatprep.subr.mxu0 0.0
    %1240 = vmatpush1.msra.mxu0 0.0
    %1241 = vmatprep.subr.mxu0 0.0
    %1242 = vmatpush1.msra.mxu0 0.0
    %1243 = vmatprep.subr.mxu0 0.0
    %1244 = vmatpush1.msra.mxu0 0.0
    %1245 = vmatprep.subr.mxu0 0.0
    %1246 = vmatpush1.msra.mxu0 0.0
    %1247 = vmatprep.subr.mxu0 0.0
    %1248 = vmatpush1.msra.mxu0 0.0
    %1249 = vmatprep.subr.mxu0 0.0
    %1250 = vmatpush1.msra.mxu0 0.0
    %1251 = vmatprep.subr.mxu0 0.0
    %1252 = vmatpush1.msra.mxu0 0.0
    %1253 = vmatprep.subr.mxu0 0.0
    %1254 = vmatpush1.msra.mxu0 0.0
    %1255 = vmatprep.subr.mxu0 0.0
    %1256 = vmatpush1.msra.mxu0 0.0
    %1257 = vmatprep.subr.mxu0 0.0
    %1258 = vmatpush1.msra.mxu0 0.0
    %1259 = vmatprep.subr.mxu0 0.0
    %1260 = vmatpush1.msra.mxu0 0.0
    %1261 = vmatprep.subr.mxu0 0.0
    %1262 = vmatpush1.msra.mxu0 0.0
    %1263 = vmatprep.subr.mxu0 0.0
    %1264 = vmatpush1.msra.mxu0 0.0
    %1265 = vmatprep.subr.mxu0 0.0
    %1266 = vmatpush1.msra.mxu0 0.0
    %1267 = vmatprep.subr.mxu0 0.0
    %1268 = vmatpush1.msra.mxu0 0.0
    %1269 = vmatprep.subr.mxu0 0.0
    %1270 = vmatpush1.msra.mxu0 0.0
    %1271 = vmatprep.mubr.f32.mxu0 0.0
    %1272 = vmatmul.mubr.f32.gmra.mrb[0].mxu0 %v1201
    %v1273 = vpop.f32.mrb[0].mxu0
    %v1274 = vadd.f32 0.0, %v1273
    %v1275 = vpop.f32.mrb[0].mxu0
    %v1276 = vadd.f32 0.0, %v1275
    %1277 = vdwg.mxu0
    %1278 = vmatprep.subr.mxu0 %v440
    %1279 = vmatpush1.msra.mxu0 %v439
    %1280 = vmatprep.subr.mxu0 %v444
    %1281 = vmatpush1.msra.mxu0 %v443
    %1282 = vmatprep.subr.mxu0 %v448
    %1283 = vmatpush1.msra.mxu0 %v447
    %1284 = vmatprep.subr.mxu0 %v452
    %1285 = vmatpush1.msra.mxu0 %v451
    %1286 = vmatprep.subr.mxu0 %v456
    %1287 = vmatpush1.msra.mxu0 %v455
    %1288 = vmatprep.subr.mxu0 %v460
    %1289 = vmatpush1.msra.mxu0 %v459
    %1290 = vmatprep.subr.mxu0 %v464
    %1291 = vmatpush1.msra.mxu0 %v463
    %1292 = vmatprep.subr.mxu0 %v468
    %1293 = vmatpush1.msra.mxu0 %v467
    %1294 = vmatprep.subr.mxu0 %v472
    %1295 = vmatpush1.msra.mxu0 %v471
    %1296 = vmatprep.subr.mxu0 %v476
    %1297 = vmatpush1.msra.mxu0 %v475
    %1298 = vmatprep.subr.mxu0 %v480
    %1299 = vmatpush1.msra.mxu0 %v479
    %1300 = vmatprep.subr.mxu0 %v484
    %1301 = vmatpush1.msra.mxu0 %v483
    %1302 = vmatprep.subr.mxu0 %v488
    %1303 = vmatpush1.msra.mxu0 %v487
    %1304 = vmatprep.subr.mxu0 %v492
    %1305 = vmatpush1.msra.mxu0 %v491
    %1306 = vmatprep.subr.mxu0 %v496
    %1307 = vmatpush1.msra.mxu0 %v495
    %1308 = vmatprep.subr.mxu0 %v500
    %1309 = vmatpush1.msra.mxu0 %v499
    %1310 = vmatprep.subr.mxu0 0.0
    %1311 = vmatpush1.msra.mxu0 0.0
    %1312 = vmatprep.subr.mxu0 0.0
    %1313 = vmatpush1.msra.mxu0 0.0
    %1314 = vmatprep.subr.mxu0 0.0
    %1315 = vmatpush1.msra.mxu0 0.0
    %1316 = vmatprep.subr.mxu0 0.0
    %1317 = vmatpush1.msra.mxu0 0.0
    %1318 = vmatprep.subr.mxu0 0.0
    %1319 = vmatpush1.msra.mxu0 0.0
    %1320 = vmatprep.subr.mxu0 0.0
    %1321 = vmatpush1.msra.mxu0 0.0
    %1322 = vmatprep.subr.mxu0 0.0
    %1323 = vmatpush1.msra.mxu0 0.0
    %1324 = vmatprep.subr.mxu0 0.0
    %1325 = vmatpush1.msra.mxu0 0.0
    %1326 = vmatprep.subr.mxu0 0.0
    %1327 = vmatpush1.msra.mxu0 0.0
    %1328 = vmatprep.subr.mxu0 0.0
    %1329 = vmatpush1.msra.mxu0 0.0
    %1330 = vmatprep.subr.mxu0 0.0
    %1331 = vmatpush1.msra.mxu0 0.0
    %1332 = vmatprep.subr.mxu0 0.0
    %1333 = vmatpush1.msra.mxu0 0.0
    %1334 = vmatprep.subr.mxu0 0.0
    %1335 = vmatpush1.msra.mxu0 0.0
    %1336 = vmatprep.subr.mxu0 0.0
    %1337 = vmatpush1.msra.mxu0 0.0
    %1338 = vmatprep.subr.mxu0 0.0
    %1339 = vmatpush1.msra.mxu0 0.0
    %1340 = vmatprep.subr.mxu0 0.0
    %1341 = vmatpush1.msra.mxu0 0.0
    %1342 = vmatprep.mubr.f32.mxu0 0.0
    %1343 = vmatmul.mubr.f32.gmra.mrb[0].mxu0 %v1201
    %v1344 = vpop.f32.mrb[0].mxu0
    %v1345 = vadd.f32 0.0, %v1344
    %v1346 = vpop.f32.mrb[0].mxu0
    %v1347 = vadd.f32 0.0, %v1346
    %1348 = vdwg.mxu0
    %v1349 = vadd.f32 %v1203, %v1274
    %v1350 = vadd.f32 %v1204, %v1276
    %v1351 = vadd.f32 %v1205, %v1345
    %v1352 = vadd.f32 %v1206, %v1347
    %v1353 = vtanh.pop %v1349
    %v1354 = vxor.u32 %v1350, 2147483648
    %v1355 = vxor.u32 %v1351, 2147483648
    %v1356 = vxor.u32 %v1352, 2147483648
    %v1357 = vmul.f32 %v1354, 1.442695
    %v1358 = vpow.pop %v1357
    %v1359 = vmul.f32 %v1355, 1.442695
    %v1360 = vpow.pop %v1359
    %v1361 = vmul.f32 %v1356, 1.442695
    %v1362 = vpow.pop %v1361
    %v1363 = vadd.f32 %v1358, 1.0
    %v1364 = vadd.f32 %v1360, 1.0
    %v1365 = vadd.f32 %v1362, 1.0
    %v1366 = vrcp.pop %v1363
    %v1367 = vmul.f32 1.0, %v1366
    %v1368 = vrcp.pop %v1364
    %v1369 = vmul.f32 1.0, %v1368
    %v1370 = vrcp.pop %v1365
    %v1371 = vmul.f32 1.0, %v1370
    %v1372 = vmul.f32 %v1353, %v1367
    %v1373 = vmul.f32 %v1199, %v1369
    %v1374 = vadd.f32 %v1372, %v1373
    %v1375 = vtanh.pop %v1374
    %v1376 = vmul.f32 %v1375, %v1371
    %s1377 = scalar_lea.vmem [#allocation2], 160
    %v1378 = vld [vmem:[%s1377] sm:$0xff]
    %v1379 = vld [vmem:[%s1377 + $0x8] sm:$0xff]
    %v1380 = vld [vmem:[%s1377 + $0x10] sm:$0xff]
    %v1381 = vld [vmem:[%s1377 + $0x18] sm:$0xff]
    %1382 = vmatprep.subr.mxu0 %v438
    %1383 = vmatpush1.msra.mxu0 %v437
    %1384 = vmatprep.subr.mxu0 %v442
    %1385 = vmatpush1.msra.mxu0 %v441
    %1386 = vmatprep.subr.mxu0 %v446
    %1387 = vmatpush1.msra.mxu0 %v445
    %1388 = vmatprep.subr.mxu0 %v450
    %1389 = vmatpush1.msra.mxu0 %v449
    %1390 = vmatprep.subr.mxu0 %v454
    %1391 = vmatpush1.msra.mxu0 %v453
    %1392 = vmatprep.subr.mxu0 %v458
    %1393 = vmatpush1.msra.mxu0 %v457
    %1394 = vmatprep.subr.mxu0 %v462
    %1395 = vmatpush1.msra.mxu0 %v461
    %1396 = vmatprep.subr.mxu0 %v466
    %1397 = vmatpush1.msra.mxu0 %v465
    %1398 = vmatprep.subr.mxu0 %v470
    %1399 = vmatpush1.msra.mxu0 %v469
    %1400 = vmatprep.subr.mxu0 %v474
    %1401 = vmatpush1.msra.mxu0 %v473
    %1402 = vmatprep.subr.mxu0 %v478
    %1403 = vmatpush1.msra.mxu0 %v477
    %1404 = vmatprep.subr.mxu0 %v482
    %1405 = vmatpush1.msra.mxu0 %v481
    %1406 = vmatprep.subr.mxu0 %v486
    %1407 = vmatpush1.msra.mxu0 %v485
    %1408 = vmatprep.subr.mxu0 %v490
    %1409 = vmatpush1.msra.mxu0 %v489
    %1410 = vmatprep.subr.mxu0 %v494
    %1411 = vmatpush1.msra.mxu0 %v493
    %1412 = vmatprep.subr.mxu0 %v498
    %1413 = vmatpush1.msra.mxu0 %v497
    %1414 = vmatprep.subr.mxu0 0.0
    %1415 = vmatpush1.msra.mxu0 0.0
    %1416 = vmatprep.subr.mxu0 0.0
    %1417 = vmatpush1.msra.mxu0 0.0
    %1418 = vmatprep.subr.mxu0 0.0
    %1419 = vmatpush1.msra.mxu0 0.0
    %1420 = vmatprep.subr.mxu0 0.0
    %1421 = vmatpush1.msra.mxu0 0.0
    %1422 = vmatprep.subr.mxu0 0.0
    %1423 = vmatpush1.msra.mxu0 0.0
    %1424 = vmatprep.subr.mxu0 0.0
    %1425 = vmatpush1.msra.mxu0 0.0
    %1426 = vmatprep.subr.mxu0 0.0
    %1427 = vmatpush1.msra.mxu0 0.0
    %1428 = vmatprep.subr.mxu0 0.0
    %1429 = vmatpush1.msra.mxu0 0.0
    %1430 = vmatprep.subr.mxu0 0.0
    %1431 = vmatpush1.msra.mxu0 0.0
    %1432 = vmatprep.subr.mxu0 0.0
    %1433 = vmatpush1.msra.mxu0 0.0
    %1434 = vmatprep.subr.mxu0 0.0
    %1435 = vmatpush1.msra.mxu0 0.0
    %1436 = vmatprep.subr.mxu0 0.0
    %1437 = vmatpush1.msra.mxu0 0.0
    %1438 = vmatprep.subr.mxu0 0.0
    %1439 = vmatpush1.msra.mxu0 0.0
    %1440 = vmatprep.subr.mxu0 0.0
    %1441 = vmatpush1.msra.mxu0 0.0
    %1442 = vmatprep.subr.mxu0 0.0
    %1443 = vmatpush1.msra.mxu0 0.0
    %1444 = vmatprep.subr.mxu0 0.0
    %1445 = vmatpush1.msra.mxu0 0.0
    %1446 = vmatprep.mubr.f32.mxu0 0.0
    %1447 = vmatmul.mubr.f32.gmra.mrb[0].mxu0 %v1376
    %v1448 = vpop.f32.mrb[0].mxu0
    %v1449 = vadd.f32 0.0, %v1448
    %v1450 = vpop.f32.mrb[0].mxu0
    %v1451 = vadd.f32 0.0, %v1450
    %1452 = vdwg.mxu0
    %1453 = vmatprep.subr.mxu0 %v440
    %1454 = vmatpush1.msra.mxu0 %v439
    %1455 = vmatprep.subr.mxu0 %v444
    %1456 = vmatpush1.msra.mxu0 %v443
    %1457 = vmatprep.subr.mxu0 %v448
    %1458 = vmatpush1.msra.mxu0 %v447
    %1459 = vmatprep.subr.mxu0 %v452
    %1460 = vmatpush1.msra.mxu0 %v451
    %1461 = vmatprep.subr.mxu0 %v456
    %1462 = vmatpush1.msra.mxu0 %v455
    %1463 = vmatprep.subr.mxu0 %v460
    %1464 = vmatpush1.msra.mxu0 %v459
    %1465 = vmatprep.subr.mxu0 %v464
    %1466 = vmatpush1.msra.mxu0 %v463
    %1467 = vmatprep.subr.mxu0 %v468
    %1468 = vmatpush1.msra.mxu0 %v467
    %1469 = vmatprep.subr.mxu0 %v472
    %1470 = vmatpush1.msra.mxu0 %v471
    %1471 = vmatprep.subr.mxu0 %v476
    %1472 = vmatpush1.msra.mxu0 %v475
    %1473 = vmatprep.subr.mxu0 %v480
    %1474 = vmatpush1.msra.mxu0 %v479
    %1475 = vmatprep.subr.mxu0 %v484
    %1476 = vmatpush1.msra.mxu0 %v483
    %1477 = vmatprep.subr.mxu0 %v488
    %1478 = vmatpush1.msra.mxu0 %v487
    %1479 = vmatprep.subr.mxu0 %v492
    %1480 = vmatpush1.msra.mxu0 %v491
    %1481 = vmatprep.subr.mxu0 %v496
    %1482 = vmatpush1.msra.mxu0 %v495
    %1483 = vmatprep.subr.mxu0 %v500
    %1484 = vmatpush1.msra.mxu0 %v499
    %1485 = vmatprep.subr.mxu0 0.0
    %1486 = vmatpush1.msra.mxu0 0.0
    %1487 = vmatprep.subr.mxu0 0.0
    %1488 = vmatpush1.msra.mxu0 0.0
    %1489 = vmatprep.subr.mxu0 0.0
    %1490 = vmatpush1.msra.mxu0 0.0
    %1491 = vmatprep.subr.mxu0 0.0
    %1492 = vmatpush1.msra.mxu0 0.0
    %1493 = vmatprep.subr.mxu0 0.0
    %1494 = vmatpush1.msra.mxu0 0.0
    %1495 = vmatprep.subr.mxu0 0.0
    %1496 = vmatpush1.msra.mxu0 0.0
    %1497 = vmatprep.subr.mxu0 0.0
    %1498 = vmatpush1.msra.mxu0 0.0
    %1499 = vmatprep.subr.mxu0 0.0
    %1500 = vmatpush1.msra.mxu0 0.0
    %1501 = vmatprep.subr.mxu0 0.0
    %1502 = vmatpush1.msra.mxu0 0.0
    %1503 = vmatprep.subr.mxu0 0.0
    %1504 = vmatpush1.msra.mxu0 0.0
    %1505 = vmatprep.subr.mxu0 0.0
    %1506 = vmatpush1.msra.mxu0 0.0
    %1507 = vmatprep.subr.mxu0 0.0
    %1508 = vmatpush1.msra.mxu0 0.0
    %1509 = vmatprep.subr.mxu0 0.0
    %1510 = vmatpush1.msra.mxu0 0.0
    %1511 = vmatprep.subr.mxu0 0.0
    %1512 = vmatpush1.msra.mxu0 0.0
    %1513 = vmatprep.subr.mxu0 0.0
    %1514 = vmatpush1.msra.mxu0 0.0
    %1515 = vmatprep.subr.mxu0 0.0
    %1516 = vmatpush1.msra.mxu0 0.0
    %1517 = vmatprep.mubr.f32.mxu0 0.0
    %1518 = vmatmul.mubr.f32.gmra.mrb[0].mxu0 %v1376
    %v1519 = vpop.f32.mrb[0].mxu0
    %v1520 = vadd.f32 0.0, %v1519
    %v1521 = vpop.f32.mrb[0].mxu0
    %v1522 = vadd.f32 0.0, %v1521
    %1523 = vdwg.mxu0
    %v1524 = vadd.f32 %v1378, %v1449
    %v1525 = vadd.f32 %v1379, %v1451
    %v1526 = vadd.f32 %v1380, %v1520
    %v1527 = vadd.f32 %v1381, %v1522
    %v1528 = vtanh.pop %v1524
    %v1529 = vxor.u32 %v1525, 2147483648
    %v1530 = vxor.u32 %v1526, 2147483648
    %v1531 = vxor.u32 %v1527, 2147483648
    %v1532 = vmul.f32 %v1529, 1.442695
    %v1533 = vpow.pop %v1532
    %v1534 = vmul.f32 %v1530, 1.442695
    %v1535 = vpow.pop %v1534
    %v1536 = vmul.f32 %v1531, 1.442695
    %v1537 = vpow.pop %v1536
    %v1538 = vadd.f32 %v1533, 1.0
    %v1539 = vadd.f32 %v1535, 1.0
    %v1540 = vadd.f32 %v1537, 1.0
    %v1541 = vrcp.pop %v1538
    %v1542 = vmul.f32 1.0, %v1541
    %v1543 = vrcp.pop %v1539
    %v1544 = vmul.f32 1.0, %v1543
    %v1545 = vrcp.pop %v1540
    %v1546 = vmul.f32 1.0, %v1545
    %v1547 = vmul.f32 %v1528, %v1542
    %v1548 = vmul.f32 %v1374, %v1544
    %v1549 = vadd.f32 %v1547, %v1548
    %v1550 = vtanh.pop %v1549
    %v1551 = vmul.f32 %v1550, %v1546
    %s1552 = scalar_lea.vmem [#allocation2], 192
    %v1553 = vld [vmem:[%s1552] sm:$0xff]
    %v1554 = vld [vmem:[%s1552 + $0x8] sm:$0xff]
    %v1555 = vld [vmem:[%s1552 + $0x10] sm:$0xff]
    %v1556 = vld [vmem:[%s1552 + $0x18] sm:$0xff]
    %1557 = vmatprep.subr.mxu0 %v438
    %1558 = vmatpush1.msra.mxu0 %v437
    %1559 = vmatprep.subr.mxu0 %v442
    %1560 = vmatpush1.msra.mxu0 %v441
    %1561 = vmatprep.subr.mxu0 %v446
    %1562 = vmatpush1.msra.mxu0 %v445
    %1563 = vmatprep.subr.mxu0 %v450
    %1564 = vmatpush1.msra.mxu0 %v449
    %1565 = vmatprep.subr.mxu0 %v454
    %1566 = vmatpush1.msra.mxu0 %v453
    %1567 = vmatprep.subr.mxu0 %v458
    %1568 = vmatpush1.msra.mxu0 %v457
    %1569 = vmatprep.subr.mxu0 %v462
    %1570 = vmatpush1.msra.mxu0 %v461
    %1571 = vmatprep.subr.mxu0 %v466
    %1572 = vmatpush1.msra.mxu0 %v465
    %1573 = vmatprep.subr.mxu0 %v470
    %1574 = vmatpush1.msra.mxu0 %v469
    %1575 = vmatprep.subr.mxu0 %v474
    %1576 = vmatpush1.msra.mxu0 %v473
    %1577 = vmatprep.subr.mxu0 %v478
    %1578 = vmatpush1.msra.mxu0 %v477
    %1579 = vmatprep.subr.mxu0 %v482
    %1580 = vmatpush1.msra.mxu0 %v481
    %1581 = vmatprep.subr.mxu0 %v486
    %1582 = vmatpush1.msra.mxu0 %v485
    %1583 = vmatprep.subr.mxu0 %v490
    %1584 = vmatpush1.msra.mxu0 %v489
    %1585 = vmatprep.subr.mxu0 %v494
    %1586 = vmatpush1.msra.mxu0 %v493
    %1587 = vmatprep.subr.mxu0 %v498
    %1588 = vmatpush1.msra.mxu0 %v497
    %1589 = vmatprep.subr.mxu0 0.0
    %1590 = vmatpush1.msra.mxu0 0.0
    %1591 = vmatprep.subr.mxu0 0.0
    %1592 = vmatpush1.msra.mxu0 0.0
    %1593 = vmatprep.subr.mxu0 0.0
    %1594 = vmatpush1.msra.mxu0 0.0
    %1595 = vmatprep.subr.mxu0 0.0
    %1596 = vmatpush1.msra.mxu0 0.0
    %1597 = vmatprep.subr.mxu0 0.0
    %1598 = vmatpush1.msra.mxu0 0.0
    %1599 = vmatprep.subr.mxu0 0.0
    %1600 = vmatpush1.msra.mxu0 0.0
    %1601 = vmatprep.subr.mxu0 0.0
    %1602 = vmatpush1.msra.mxu0 0.0
    %1603 = vmatprep.subr.mxu0 0.0
    %1604 = vmatpush1.msra.mxu0 0.0
    %1605 = vmatprep.subr.mxu0 0.0
    %1606 = vmatpush1.msra.mxu0 0.0
    %1607 = vmatprep.subr.mxu0 0.0
    %1608 = vmatpush1.msra.mxu0 0.0
    %1609 = vmatprep.subr.mxu0 0.0
    %1610 = vmatpush1.msra.mxu0 0.0
    %1611 = vmatprep.subr.mxu0 0.0
    %1612 = vmatpush1.msra.mxu0 0.0
    %1613 = vmatprep.subr.mxu0 0.0
    %1614 = vmatpush1.msra.mxu0 0.0
    %1615 = vmatprep.subr.mxu0 0.0
    %1616 = vmatpush1.msra.mxu0 0.0
    %1617 = vmatprep.subr.mxu0 0.0
    %1618 = vmatpush1.msra.mxu0 0.0
    %1619 = vmatprep.subr.mxu0 0.0
    %1620 = vmatpush1.msra.mxu0 0.0
    %1621 = vmatprep.mubr.f32.mxu0 0.0
    %1622 = vmatmul.mubr.f32.gmra.mrb[0].mxu0 %v1551
    %v1623 = vpop.f32.mrb[0].mxu0
    %v1624 = vadd.f32 0.0, %v1623
    %v1625 = vpop.f32.mrb[0].mxu0
    %v1626 = vadd.f32 0.0, %v1625
    %1627 = vdwg.mxu0
    %1628 = vmatprep.subr.mxu0 %v440
    %1629 = vmatpush1.msra.mxu0 %v439
    %1630 = vmatprep.subr.mxu0 %v444
    %1631 = vmatpush1.msra.mxu0 %v443
    %1632 = vmatprep.subr.mxu0 %v448
    %1633 = vmatpush1.msra.mxu0 %v447
    %1634 = vmatprep.subr.mxu0 %v452
    %1635 = vmatpush1.msra.mxu0 %v451
    %1636 = vmatprep.subr.mxu0 %v456
    %1637 = vmatpush1.msra.mxu0 %v455
    %1638 = vmatprep.subr.mxu0 %v460
    %1639 = vmatpush1.msra.mxu0 %v459
    %1640 = vmatprep.subr.mxu0 %v464
    %1641 = vmatpush1.msra.mxu0 %v463
    %1642 = vmatprep.subr.mxu0 %v468
    %1643 = vmatpush1.msra.mxu0 %v467
    %1644 = vmatprep.subr.mxu0 %v472
    %1645 = vmatpush1.msra.mxu0 %v471
    %1646 = vmatprep.subr.mxu0 %v476
    %1647 = vmatpush1.msra.mxu0 %v475
    %1648 = vmatprep.subr.mxu0 %v480
    %1649 = vmatpush1.msra.mxu0 %v479
    %1650 = vmatprep.subr.mxu0 %v484
    %1651 = vmatpush1.msra.mxu0 %v483
    %1652 = vmatprep.subr.mxu0 %v488
    %1653 = vmatpush1.msra.mxu0 %v487
    %1654 = vmatprep.subr.mxu0 %v492
    %1655 = vmatpush1.msra.mxu0 %v491
    %1656 = vmatprep.subr.mxu0 %v496
    %1657 = vmatpush1.msra.mxu0 %v495
    %1658 = vmatprep.subr.mxu0 %v500
    %1659 = vmatpush1.msra.mxu0 %v499
    %1660 = vmatprep.subr.mxu0 0.0
    %1661 = vmatpush1.msra.mxu0 0.0
    %1662 = vmatprep.subr.mxu0 0.0
    %1663 = vmatpush1.msra.mxu0 0.0
    %1664 = vmatprep.subr.mxu0 0.0
    %1665 = vmatpush1.msra.mxu0 0.0
    %1666 = vmatprep.subr.mxu0 0.0
    %1667 = vmatpush1.msra.mxu0 0.0
    %1668 = vmatprep.subr.mxu0 0.0
    %1669 = vmatpush1.msra.mxu0 0.0
    %1670 = vmatprep.subr.mxu0 0.0
    %1671 = vmatpush1.msra.mxu0 0.0
    %1672 = vmatprep.subr.mxu0 0.0
    %1673 = vmatpush1.msra.mxu0 0.0
    %1674 = vmatprep.subr.mxu0 0.0
    %1675 = vmatpush1.msra.mxu0 0.0
    %1676 = vmatprep.subr.mxu0 0.0
    %1677 = vmatpush1.msra.mxu0 0.0
    %1678 = vmatprep.subr.mxu0 0.0
    %1679 = vmatpush1.msra.mxu0 0.0
    %1680 = vmatprep.subr.mxu0 0.0
    %1681 = vmatpush1.msra.mxu0 0.0
    %1682 = vmatprep.subr.mxu0 0.0
    %1683 = vmatpush1.msra.mxu0 0.0
    %1684 = vmatprep.subr.mxu0 0.0
    %1685 = vmatpush1.msra.mxu0 0.0
    %1686 = vmatprep.subr.mxu0 0.0
    %1687 = vmatpush1.msra.mxu0 0.0
    %1688 = vmatprep.subr.mxu0 0.0
    %1689 = vmatpush1.msra.mxu0 0.0
    %1690 = vmatprep.subr.mxu0 0.0
    %1691 = vmatpush1.msra.mxu0 0.0
    %1692 = vmatprep.mubr.f32.mxu0 0.0
    %1693 = vmatmul.mubr.f32.gmra.mrb[0].mxu0 %v1551
    %v1694 = vpop.f32.mrb[0].mxu0
    %v1695 = vadd.f32 0.0, %v1694
    %v1696 = vpop.f32.mrb[0].mxu0
    %v1697 = vadd.f32 0.0, %v1696
    %1698 = vdwg.mxu0
    %v1699 = vadd.f32 %v1553, %v1624
    %v1700 = vadd.f32 %v1554, %v1626
    %v1701 = vadd.f32 %v1555, %v1695
    %v1702 = vadd.f32 %v1556, %v1697
    %v1703 = vtanh.pop %v1699
    %v1704 = vxor.u32 %v1700, 2147483648
    %v1705 = vxor.u32 %v1701, 2147483648
    %v1706 = vxor.u32 %v1702, 2147483648
    %v1707 = vmul.f32 %v1704, 1.442695
    %v1708 = vpow.pop %v1707
    %v1709 = vmul.f32 %v1705, 1.442695
    %v1710 = vpow.pop %v1709
    %v1711 = vmul.f32 %v1706, 1.442695
    %v1712 = vpow.pop %v1711
    %v1713 = vadd.f32 %v1708, 1.0
    %v1714 = vadd.f32 %v1710, 1.0
    %v1715 = vadd.f32 %v1712, 1.0
    %v1716 = vrcp.pop %v1713
    %v1717 = vmul.f32 1.0, %v1716
    %v1718 = vrcp.pop %v1714
    %v1719 = vmul.f32 1.0, %v1718
    %v1720 = vrcp.pop %v1715
    %v1721 = vmul.f32 1.0, %v1720
    %v1722 = vmul.f32 %v1703, %v1717
    %v1723 = vmul.f32 %v1549, %v1719
    %v1724 = vadd.f32 %v1722, %v1723
    %v1725 = vtanh.pop %v1724
    %v1726 = vmul.f32 %v1725, %v1721
    %s1727 = scalar_lea.vmem [#allocation2], 224
    %v1728 = vld [vmem:[%s1727] sm:$0xff]
    %v1729 = vld [vmem:[%s1727 + $0x8] sm:$0xff]
    %v1730 = vld [vmem:[%s1727 + $0x10] sm:$0xff]
    %v1731 = vld [vmem:[%s1727 + $0x18] sm:$0xff]
    %1732 = vmatprep.subr.mxu0 %v438
    %1733 = vmatpush1.msra.mxu0 %v437
    %1734 = vmatprep.subr.mxu0 %v442
    %1735 = vmatpush1.msra.mxu0 %v441
    %1736 = vmatprep.subr.mxu0 %v446
    %1737 = vmatpush1.msra.mxu0 %v445
    %1738 = vmatprep.subr.mxu0 %v450
    %1739 = vmatpush1.msra.mxu0 %v449
    %1740 = vmatprep.subr.mxu0 %v454
    %1741 = vmatpush1.msra.mxu0 %v453
    %1742 = vmatprep.subr.mxu0 %v458
    %1743 = vmatpush1.msra.mxu0 %v457
    %1744 = vmatprep.subr.mxu0 %v462
    %1745 = vmatpush1.msra.mxu0 %v461
    %1746 = vmatprep.subr.mxu0 %v466
    %1747 = vmatpush1.msra.mxu0 %v465
    %1748 = vmatprep.subr.mxu0 %v470
    %1749 = vmatpush1.msra.mxu0 %v469
    %1750 = vmatprep.subr.mxu0 %v474
    %1751 = vmatpush1.msra.mxu0 %v473
    %1752 = vmatprep.subr.mxu0 %v478
    %1753 = vmatpush1.msra.mxu0 %v477
    %1754 = vmatprep.subr.mxu0 %v482
    %1755 = vmatpush1.msra.mxu0 %v481
    %1756 = vmatprep.subr.mxu0 %v486
    %1757 = vmatpush1.msra.mxu0 %v485
    %1758 = vmatprep.subr.mxu0 %v490
    %1759 = vmatpush1.msra.mxu0 %v489
    %1760 = vmatprep.subr.mxu0 %v494
    %1761 = vmatpush1.msra.mxu0 %v493
    %1762 = vmatprep.subr.mxu0 %v498
    %1763 = vmatpush1.msra.mxu0 %v497
    %1764 = vmatprep.subr.mxu0 0.0
    %1765 = vmatpush1.msra.mxu0 0.0
    %1766 = vmatprep.subr.mxu0 0.0
    %1767 = vmatpush1.msra.mxu0 0.0
    %1768 = vmatprep.subr.mxu0 0.0
    %1769 = vmatpush1.msra.mxu0 0.0
    %1770 = vmatprep.subr.mxu0 0.0
    %1771 = vmatpush1.msra.mxu0 0.0
    %1772 = vmatprep.subr.mxu0 0.0
    %1773 = vmatpush1.msra.mxu0 0.0
    %1774 = vmatprep.subr.mxu0 0.0
    %1775 = vmatpush1.msra.mxu0 0.0
    %1776 = vmatprep.subr.mxu0 0.0
    %1777 = vmatpush1.msra.mxu0 0.0
    %1778 = vmatprep.subr.mxu0 0.0
    %1779 = vmatpush1.msra.mxu0 0.0
    %1780 = vmatprep.subr.mxu0 0.0
    %1781 = vmatpush1.msra.mxu0 0.0
    %1782 = vmatprep.subr.mxu0 0.0
    %1783 = vmatpush1.msra.mxu0 0.0
    %1784 = vmatprep.subr.mxu0 0.0
    %1785 = vmatpush1.msra.mxu0 0.0
    %1786 = vmatprep.subr.mxu0 0.0
    %1787 = vmatpush1.msra.mxu0 0.0
    %1788 = vmatprep.subr.mxu0 0.0
    %1789 = vmatpush1.msra.mxu0 0.0
    %1790 = vmatprep.subr.mxu0 0.0
    %1791 = vmatpush1.msra.mxu0 0.0
    %1792 = vmatprep.subr.mxu0 0.0
    %1793 = vmatpush1.msra.mxu0 0.0
    %1794 = vmatprep.subr.mxu0 0.0
    %1795 = vmatpush1.msra.mxu0 0.0
    %1796 = vmatprep.mubr.f32.mxu0 0.0
    %1797 = vmatmul.mubr.f32.gmra.mrb[0].mxu0 %v1726
    %v1798 = vpop.f32.mrb[0].mxu0
    %v1799 = vadd.f32 0.0, %v1798
    %v1800 = vpop.f32.mrb[0].mxu0
    %v1801 = vadd.f32 0.0, %v1800
    %1802 = vdwg.mxu0
    %1803 = vmatprep.subr.mxu0 %v440
    %1804 = vmatpush1.msra.mxu0 %v439
    %1805 = vmatprep.subr.mxu0 %v444
    %1806 = vmatpush1.msra.mxu0 %v443
    %1807 = vmatprep.subr.mxu0 %v448
    %1808 = vmatpush1.msra.mxu0 %v447
    %1809 = vmatprep.subr.mxu0 %v452
    %1810 = vmatpush1.msra.mxu0 %v451
    %1811 = vmatprep.subr.mxu0 %v456
    %1812 = vmatpush1.msra.mxu0 %v455
    %1813 = vmatprep.subr.mxu0 %v460
    %1814 = vmatpush1.msra.mxu0 %v459
    %1815 = vmatprep.subr.mxu0 %v464
    %1816 = vmatpush1.msra.mxu0 %v463
    %1817 = vmatprep.subr.mxu0 %v468
    %1818 = vmatpush1.msra.mxu0 %v467
    %1819 = vmatprep.subr.mxu0 %v472
    %1820 = vmatpush1.msra.mxu0 %v471
    %1821 = vmatprep.subr.mxu0 %v476
    %1822 = vmatpush1.msra.mxu0 %v475
    %1823 = vmatprep.subr.mxu0 %v480
    %1824 = vmatpush1.msra.mxu0 %v479
    %1825 = vmatprep.subr.mxu0 %v484
    %1826 = vmatpush1.msra.mxu0 %v483
    %1827 = vmatprep.subr.mxu0 %v488
    %1828 = vmatpush1.msra.mxu0 %v487
    %1829 = vmatprep.subr.mxu0 %v492
    %1830 = vmatpush1.msra.mxu0 %v491
    %1831 = vmatprep.subr.mxu0 %v496
    %1832 = vmatpush1.msra.mxu0 %v495
    %1833 = vmatprep.subr.mxu0 %v500
    %1834 = vmatpush1.msra.mxu0 %v499
    %1835 = vmatprep.subr.mxu0 0.0
    %1836 = vmatpush1.msra.mxu0 0.0
    %1837 = vmatprep.subr.mxu0 0.0
    %1838 = vmatpush1.msra.mxu0 0.0
    %1839 = vmatprep.subr.mxu0 0.0
    %1840 = vmatpush1.msra.mxu0 0.0
    %1841 = vmatprep.subr.mxu0 0.0
    %1842 = vmatpush1.msra.mxu0 0.0
    %1843 = vmatprep.subr.mxu0 0.0
    %1844 = vmatpush1.msra.mxu0 0.0
    %1845 = vmatprep.subr.mxu0 0.0
    %1846 = vmatpush1.msra.mxu0 0.0
    %1847 = vmatprep.subr.mxu0 0.0
    %1848 = vmatpush1.msra.mxu0 0.0
    %1849 = vmatprep.subr.mxu0 0.0
    %1850 = vmatpush1.msra.mxu0 0.0
    %1851 = vmatprep.subr.mxu0 0.0
    %1852 = vmatpush1.msra.mxu0 0.0
    %1853 = vmatprep.subr.mxu0 0.0
    %1854 = vmatpush1.msra.mxu0 0.0
    %1855 = vmatprep.subr.mxu0 0.0
    %1856 = vmatpush1.msra.mxu0 0.0
    %1857 = vmatprep.subr.mxu0 0.0
    %1858 = vmatpush1.msra.mxu0 0.0
    %1859 = vmatprep.subr.mxu0 0.0
    %1860 = vmatpush1.msra.mxu0 0.0
    %1861 = vmatprep.subr.mxu0 0.0
    %1862 = vmatpush1.msra.mxu0 0.0
    %1863 = vmatprep.subr.mxu0 0.0
    %1864 = vmatpush1.msra.mxu0 0.0
    %1865 = vmatprep.subr.mxu0 0.0
    %1866 = vmatpush1.msra.mxu0 0.0
    %1867 = vmatprep.mubr.f32.mxu0 0.0
    %1868 = vmatmul.mubr.f32.gmra.mrb[0].mxu0 %v1726
    %v1869 = vpop.f32.mrb[0].mxu0
    %v1870 = vadd.f32 0.0, %v1869
    %v1871 = vpop.f32.mrb[0].mxu0
    %v1872 = vadd.f32 0.0, %v1871
    %1873 = vdwg.mxu0
    %v1874 = vadd.f32 %v1728, %v1799
    %v1875 = vadd.f32 %v1729, %v1801
    %v1876 = vadd.f32 %v1730, %v1870
    %v1877 = vadd.f32 %v1731, %v1872
    %v1878 = vtanh.pop %v1874
    %v1879 = vxor.u32 %v1875, 2147483648
    %v1880 = vxor.u32 %v1876, 2147483648
    %v1881 = vxor.u32 %v1877, 2147483648
    %v1882 = vmul.f32 %v1879, 1.442695
    %v1883 = vpow.pop %v1882
    %v1884 = vmul.f32 %v1880, 1.442695
    %v1885 = vpow.pop %v1884
    %v1886 = vmul.f32 %v1881, 1.442695
    %v1887 = vpow.pop %v1886
    %v1888 = vadd.f32 %v1883, 1.0
    %v1889 = vadd.f32 %v1885, 1.0
    %v1890 = vadd.f32 %v1887, 1.0
    %v1891 = vrcp.pop %v1888
    %v1892 = vmul.f32 1.0, %v1891
    %v1893 = vrcp.pop %v1889
    %v1894 = vmul.f32 1.0, %v1893
    %v1895 = vrcp.pop %v1890
    %v1896 = vmul.f32 1.0, %v1895
    %v1897 = vmul.f32 %v1878, %v1892
    %v1898 = vmul.f32 %v1724, %v1894
    %v1899 = vadd.f32 %v1897, %v1898
    %v1900 = vtanh.pop %v1899
    %v1901 = vmul.f32 %v1900, %v1896
    %1902 = vst [vmem:[#allocation3] sm:$0xff] %v1901
    %1903 = vst [vmem:[#allocation4] sm:$0xff] %v1899
    // Predicated region
    $region46: #{tpu_custom_call.1} parent=1 // pred_check
      %p1904 = pneg %p79
    $region47: #{tpu_custom_call.1} parent=1 // pred_check_branch
      %1906 = sbr.rel (%p1904) target = $region49
    $region48: #{tpu_custom_call.1} parent=1 // pred_region
      %v1907 = vld [vmem:[#allocation11] sm:$0xff]
      %v1908 = vld [vmem:[#allocation11 + $0x8] sm:$0xff]
      %v1909 = vld [vmem:[#allocation11 + $0x10] sm:$0xff]
      %v1910 = vld [vmem:[#allocation11 + $0x18] sm:$0xff]
      %v1911 = vld [vmem:[#allocation11 + $0x20] sm:$0xff]
      %v1912 = vld [vmem:[#allocation11 + $0x28] sm:$0xff]
      %v1913 = vld [vmem:[#allocation11 + $0x30] sm:$0xff]
      %v1914 = vld [vmem:[#allocation11 + $0x38] sm:$0xff]
      %v1915 = vld [vmem:[#allocation11 + $0x40] sm:$0xff]
      %v1916 = vld [vmem:[#allocation11 + $0x48] sm:$0xff]
      %v1917 = vld [vmem:[#allocation11 + $0x50] sm:$0xff]
      %v1918 = vld [vmem:[#allocation11 + $0x58] sm:$0xff]
      %v1919 = vld [vmem:[#allocation11 + $0x60] sm:$0xff]
      %v1920 = vld [vmem:[#allocation11 + $0x68] sm:$0xff]
      %v1921 = vld [vmem:[#allocation11 + $0x70] sm:$0xff]
      %v1922 = vld [vmem:[#allocation11 + $0x78] sm:$0xff]
      %v1923 = vld [vmem:[%s5] sm:$0x1]
      %v1925 = vlaneseq
      %v1926 = vshrl.u32 %v1925, 7
      %v1927 = vsub.s32 0, %v1926
      %v1928 = vrot.slane %v1923, %v1927
      %1930 = vmatprep.subr.mxu0 0.0
      %1931 = vmatpush1.msra.mxu0 %v1907
      %1932 = vmatprep.subr.mxu0 0.0
      %1933 = vmatpush1.msra.mxu0 %v1908
      %1934 = vmatprep.subr.mxu0 0.0
      %1935 = vmatpush1.msra.mxu0 %v1909
      %1936 = vmatprep.subr.mxu0 0.0
      %1937 = vmatpush1.msra.mxu0 %v1910
      %1938 = vmatprep.subr.mxu0 0.0
      %1939 = vmatpush1.msra.mxu0 %v1911
      %1940 = vmatprep.subr.mxu0 0.0
      %1941 = vmatpush1.msra.mxu0 %v1912
      %1942 = vmatprep.subr.mxu0 0.0
      %1943 = vmatpush1.msra.mxu0 %v1913
      %1944 = vmatprep.subr.mxu0 0.0
      %1945 = vmatpush1.msra.mxu0 %v1914
      %1946 = vmatprep.subr.mxu0 0.0
      %1947 = vmatpush1.msra.mxu0 %v1915
      %1948 = vmatprep.subr.mxu0 0.0
      %1949 = vmatpush1.msra.mxu0 %v1916
      %1950 = vmatprep.subr.mxu0 0.0
      %1951 = vmatpush1.msra.mxu0 %v1917
      %1952 = vmatprep.subr.mxu0 0.0
      %1953 = vmatpush1.msra.mxu0 %v1918
      %1954 = vmatprep.subr.mxu0 0.0
      %1955 = vmatpush1.msra.mxu0 %v1919
      %1956 = vmatprep.subr.mxu0 0.0
      %1957 = vmatpush1.msra.mxu0 %v1920
      %1958 = vmatprep.subr.mxu0 0.0
      %1959 = vmatpush1.msra.mxu0 %v1921
      %1960 = vmatprep.subr.mxu0 0.0
      %1961 = vmatpush1.msra.mxu0 %v1922
      %1962 = vmatprep.subr.mxu0 0.0
      %1963 = vmatpush1.msra.mxu0 0.0
      %1964 = vmatprep.subr.mxu0 0.0
      %1965 = vmatpush1.msra.mxu0 0.0
      %1966 = vmatprep.subr.mxu0 0.0
      %1967 = vmatpush1.msra.mxu0 0.0
      %1968 = vmatprep.subr.mxu0 0.0
      %1969 = vmatpush1.msra.mxu0 0.0
      %1970 = vmatprep.subr.mxu0 0.0
      %1971 = vmatpush1.msra.mxu0 0.0
      %1972 = vmatprep.subr.mxu0 0.0
      %1973 = vmatpush1.msra.mxu0 0.0
      %1974 = vmatprep.subr.mxu0 0.0
      %1975 = vmatpush1.msra.mxu0 0.0
      %1976 = vmatprep.subr.mxu0 0.0
      %1977 = vmatpush1.msra.mxu0 0.0
      %1978 = vmatprep.subr.mxu0 0.0
      %1979 = vmatpush1.msra.mxu0 0.0
      %1980 = vmatprep.subr.mxu0 0.0
      %1981 = vmatpush1.msra.mxu0 0.0
      %1982 = vmatprep.subr.mxu0 0.0
      %1983 = vmatpush1.msra.mxu0 0.0
      %1984 = vmatprep.subr.mxu0 0.0
      %1985 = vmatpush1.msra.mxu0 0.0
      %1986 = vmatprep.subr.mxu0 0.0
      %1987 = vmatpush1.msra.mxu0 0.0
      %1988 = vmatprep.subr.mxu0 0.0
      %1989 = vmatpush1.msra.mxu0 0.0
      %1990 = vmatprep.subr.mxu0 0.0
      %1991 = vmatpush1.msra.mxu0 0.0
      %1992 = vmatprep.subr.mxu0 0.0
      %1993 = vmatpush1.msra.mxu0 0.0
      %1994 = vmatprep.mubr.f32.mxu0 0.0
      %1995 = vmatmul.mubr.f32.gmra.mrb[0].mxu0 %v1901
      %v1996 = vpop.f32.mrb[0].mxu0
      %v1997 = vadd.f32 %v1928, %v1996
      %v1998 = vpop.f32.mrb[0].mxu0
      %1999 = vdwg.mxu0
      %2000 = vst [vmem:[#allocation13] sm:$0xff] %v1997
    $region49: #{tpu_custom_call.1} parent=1 // pred_fallthru
      _
    // Predicated region
    $region50: #{tpu_custom_call.1} parent=1 // pred_check
      _
    $region51: #{tpu_custom_call.1} parent=1 // pred_check_branch
      %2002 = sbr.rel (0) target = $region53
    $region52: #{tpu_custom_call.1} parent=1 // pred_region
      %s2004 = ssub.s32 128, 128
      %2005 = vsyncadd [#allocation7], %s2004
      %s2007 = sshll.u32 [#allocation13], 4
      %s2008 = int_to_ptr.vmem [resolvable:$true] %s2007
      %2010 = dma.vmem_to_hbm [thread:$0]  %s2008, 128, %s6, [#allocation7]
    $region53: #{tpu_custom_call.1} parent=1 // pred_fallthru
      _
    // Predicated region
    $region54: #{tpu_custom_call.1} parent=1 // pred_check
      _
    $region55: #{tpu_custom_call.1} parent=1 // pred_check_branch
      %2012 = sbr.rel (0) target = $region57
    $region56: #{tpu_custom_call.1} parent=1 // pred_region
      %2013 = dma.done [#allocation7], 128
    $region57: #{tpu_custom_call.1} parent=1 // pred_fallthru
      _
    %2014 = vsyncpa [#allocation6], 1
    %2015 = vsyncpa [#allocation9], 1
    %2016 = vsyncpa [#allocation12], 1
    %2017 = vsyncpa [#allocation7], 1

</llo_original>
